<compile_context>
chip_gen: v7x
topology: tpu7x:2x2x1
jax: 0.10.0
libtpu: 0.0.40
codegen_flags: <defaults>
</compile_context>

<pallas_src>
import functools

import jax
import jax.numpy as jnp
from jax.experimental import pallas as pl
from jax.experimental.pallas import tpu as pltpu


# ----------------------------- fused forward kernel (per batch block) -----------------------------
def _make_fused_kernel(BN, H, W, Cin, K):
    """Kernel operating on BN images at a time (grid axis = batch blocks)."""
    WC = W * Cin  # lane width of one shifted window

    def kernel(x_ref, m_ref, wblk_ref, b1_ref, w2_ref, b2_ref, o_ref):
        # x_ref:    [BN, Hp, Wp*Cin]     zero-padded images, columns ordered (w, c)     f32
        # m_ref:    [Hp, Wp*Cin]         cutout mask replicated over c, pad = 1         f32
        # wblk_ref: [K*K, W*Cin, W*Cout] block-diag expanded conv weights               bf16
        # b1_ref:   [1, W*Cout]          conv bias tiled over w                         f32
        # w2_ref:   [W*Cout, NCp]        fc weights tiled over w, pre-scaled by 1/(H*W),
        #                                zero-padded to 128 output lanes                f32
        # b2_ref:   [1, NCp]             fc bias, zero-padded to 128 lanes              f32
        # o_ref:    [BN, NCp]            lane-dense logits slab for this batch block    f32
        feat = None
        for t in range(K * K):                      # statically unrolled 3x3 taps
            dh, dw = divmod(t, K)
            lo = dw * Cin
            # Aug/MASK layer fused in: mask multiply on the shifted window (VPU, f32).
            win = x_ref[:, dh:dh + H, lo:lo + WC] * m_ref[dh:dh + H, lo:lo + WC]  # [BN, H, W*Cin]
            # Conv tap: one MXU matmul of the whole batch block against the block-diag slab.
            contrib = jnp.einsum("bhc,co->bho",
                                 win.astype(jnp.bfloat16), wblk_ref[t],
                                 preferred_element_type=jnp.float32)              # [BN, H, W*Cout]
            feat = contrib if feat is None else feat + contrib
        feat = jnp.maximum(feat + b1_ref[...], 0.0)          # bias + ReLU, f32, [BN, H, W*Cout]
        pooled = jnp.sum(feat, axis=1)                       # sum over h (XLU), [BN, W*Cout]
        # Sum over w and the 1/(H*W) pool scale are folded into w2_ref (tiled + pre-scaled),
        # so global-avg-pool + Linear collapses into one dense [BN,128]@[128,128] matmul.
        logits = jnp.dot(pooled, w2_ref[...],
                         preferred_element_type=jnp.float32) + b2_ref[...]        # [BN, NCp]
        o_ref[...] = logits.astype(o_ref.dtype)              # full-lane, unmasked store

    return kernel


# ------------------------------------ model wrapper ------------------------------------
@functools.partial(jax.jit, static_argnames=("k",))
def masked_model_forward(x_nchw, mask_hw, w1, b1, w2, b2, k=3):
    """x_nchw: [N,Cin,H,W]; mask_hw: [H,W] in {0,1}; w1: [k*k*Cin, Cout] (rows ordered
    (kh, kw, cin)); b1: [Cout]; w2: [Cout, NC]; b2: [NC]. Returns [N, NC] logits."""
    N, Cin, H, W = x_nchw.shape
    Cout = w1.shape[1]
    NC = w2.shape[1]
    pad = k // 2
    Hp, Wp = H + 2 * pad, W + 2 * pad

    BN = 8                                   # images per grid step (one f32 vreg of sublanes)
    N_pad = ((N + BN - 1) // BN) * BN
    NC_pad = 128                             # lane-dense logits slab width

    # ---- tiny layout prep on the XLA side (no activation expansion, all O(KB)) ----
    x = jnp.transpose(x_nchw, (0, 2, 3, 1)).astype(jnp.float32)        # NCHW -> NHWC
    xp = jnp.pad(x, ((0, 0), (pad, pad), (pad, pad), (0, 0)))          # same-padding halo
    x2d = xp.reshape(N, Hp, Wp * Cin)                                  # columns ordered (w, c)
    x2d = jnp.pad(x2d, ((0, N_pad - N), (0, 0), (0, 0)))               # pad batch to BN multiple

    mp = jnp.pad(mask_hw.astype(jnp.float32), ((pad, pad), (pad, pad)),
                 constant_values=1.0)                                  # pad value irrelevant (x pad = 0)
    m2d = jnp.repeat(mp, Cin, axis=1)                                  # [Hp, Wp*Cin]

    # Block-diagonal expansion of the conv weights so each 3x3 tap is a plain 2-D matmul:
    #   Wblk[t, w*Cin + c, v*Cout + o] = delta(w, v) * w1[t, c, o]
    w1_taps = w1.reshape(k * k, Cin, Cout)
    eye_w = jnp.eye(W, dtype=jnp.float32)
    wblk = jnp.einsum("wv,tco->twcvo", eye_w, w1_taps)
    wblk = wblk.reshape(k * k, W * Cin, W * Cout).astype(jnp.bfloat16)  # bf16 MXU operand

    b1t = jnp.tile(b1, W).reshape(1, W * Cout).astype(jnp.float32)      # bias tiled over w
    w2t = (jnp.tile(w2, (W, 1)) * (1.0 / (H * W))).astype(jnp.float32)  # fc tiled over w, pool scale folded
    w2p = jnp.zeros((W * Cout, NC_pad), jnp.float32).at[:, :NC].set(w2t)
    b2p = jnp.zeros((1, NC_pad), jnp.float32).at[0, :NC].set(b2.astype(jnp.float32))

    kernel = _make_fused_kernel(BN, H, W, Cin, k)

    out = pl.pallas_call(
        kernel,
        out_shape=jax.ShapeDtypeStruct((N_pad, NC_pad), jnp.float32),
        grid=(N_pad // BN,),
        in_specs=[
            pl.BlockSpec((BN, Hp, Wp * Cin), lambda n: (n, 0, 0)),          # per-block inputs
            pl.BlockSpec((Hp, Wp * Cin), lambda n: (0, 0)),                 # shared mask
            pl.BlockSpec((k * k, W * Cin, W * Cout), lambda n: (0, 0, 0)),  # conv weights (resident)
            pl.BlockSpec((1, W * Cout), lambda n: (0, 0)),                  # conv bias
            pl.BlockSpec((W * Cout, NC_pad), lambda n: (0, 0)),             # fc weights (pool folded)
            pl.BlockSpec((1, NC_pad), lambda n: (0, 0)),                    # fc bias
        ],
        out_specs=pl.BlockSpec((BN, NC_pad), lambda n: (n, 0)),
        compiler_params=pltpu.CompilerParams(dimension_semantics=("parallel",)),
    )(x2d, m2d, wblk, b1t, w2p, b2p)
    return out[:N, :NC]


# ---------------------------------- helpers / reference ----------------------------------
def make_cutout_mask(key, H, W, patch=4):
    kr, kc = jax.random.split(key)
    r0 = jax.random.randint(kr, (), 0, H - patch + 1)
    c0 = jax.random.randint(kc, (), 0, W - patch + 1)
    rows = jnp.arange(H)[:, None]
    cols = jnp.arange(W)[None, :]
    inside = (rows >= r0) & (rows < r0 + patch) & (cols >= c0) & (cols < c0 + patch)
    return jnp.where(inside, 0.0, 1.0).astype(jnp.float32)


def reference_forward(x_nchw, mask_hw, w1, b1, w2, b2, k=3):
    """Pure-JAX f32 reference (mask -> conv3x3 same-pad -> ReLU -> GAP -> FC)."""
    x = jnp.transpose(x_nchw, (0, 2, 3, 1)).astype(jnp.float32)
    x = x * mask_hw[None, :, :, None]
    N, H, W, C = x.shape
    pad = k // 2
    xp = jnp.pad(x, ((0, 0), (pad, pad), (pad, pad), (0, 0)))
    cols = []
    for dh in range(k):
        for dw in range(k):
            cols.append(xp[:, dh:dh + H, dw:dw + W, :])
    p = jnp.stack(cols, axis=-2).reshape(N * H * W, k * k * C)
    feat = jnp.maximum(p @ w1 + b1, 0.0).reshape(N, H * W, -1)
    pooled = feat.mean(axis=1)
    return pooled @ w2 + b2


# ----------------------------------------- main ------------------------------------------
if __name__ == "__main__":
    N, Cin, H, W = 2, 4, 16, 16
    Cout, K, NUM_CLASSES = 8, 3, 10

    key = jax.random.PRNGKey(0)
    k_x, k_w1, k_b1, k_w2, k_b2, k_mask = jax.random.split(key, 6)

    # Deterministic synthetic parameters (PyTorch-style uniform fan-in init).
    fan1 = K * K * Cin
    bound1 = 1.0 / jnp.sqrt(fan1)
    w1 = jax.random.uniform(k_w1, (fan1, Cout), jnp.float32, -bound1, bound1)
    b1 = jax.random.uniform(k_b1, (Cout,), jnp.float32, -bound1, bound1)

    bound2 = 1.0 / jnp.sqrt(Cout)
    w2 = jax.random.uniform(k_w2, (Cout, NUM_CLASSES), jnp.float32, -bound2, bound2)
    b2 = jax.random.uniform(k_b2, (NUM_CLASSES,), jnp.float32, -bound2, bound2)

    # Deterministic augmentation mask (the MASK_layer_list with one cutout layer).
    mask_hw = make_cutout_mask(k_mask, H, W, patch=4)

    # Example input (NCHW, matching the PyTorch convention).
    x = jax.random.normal(k_x, (N, Cin, H, W), jnp.float32)

    logits = masked_model_forward(x, mask_hw, w1, b1, w2, b2)
    jax.block_until_ready(logits)
    assert logits.shape == (N, NUM_CLASSES)

    # Loose tolerance: kernel uses bf16 MXU operands with f32 accumulation.
    ref = reference_forward(x, mask_hw, w1, b1, w2, b2)
    max_err = float(jnp.max(jnp.abs(logits - ref)))
    assert max_err < 5e-2, f"mismatch vs reference: max abs err = {max_err}"

    print("KERNEL_OK")
</pallas_src>

<mosaic_0001>
module attributes {stable_mosaic.version = 11 : i64} {
  func.func @kernel(%arg0: i32, %arg1: memref<8x18x72xf32, #tpu.memory_space<vmem>>, %arg2: memref<18x72xf32, #tpu.memory_space<vmem>>, %arg3: memref<9x64x128xbf16, #tpu.memory_space<vmem>>, %arg4: memref<1x128xf32, #tpu.memory_space<vmem>>, %arg5: memref<128x128xf32, #tpu.memory_space<vmem>>, %arg6: memref<1x128xf32, #tpu.memory_space<vmem>>, %arg7: memref<8x128xf32, #tpu.memory_space<vmem>>) attributes {dimension_semantics = [#tpu.dimension_semantics<parallel>], iteration_bounds = array<i64: 1>, scalar_prefetch = 0 : i64, scratch_operands = 0 : i64, tpu.core_type = #tpu.core_type<tc>, window_params = [{transform_indices = @transform_0, window_bounds = array<i64: 8, 18, 72>}, {pipeline_mode = #tpu.pipeline_mode<synchronous>, transform_indices = @transform_1, window_bounds = array<i64: 18, 72>}, {pipeline_mode = #tpu.pipeline_mode<synchronous>, transform_indices = @transform_2, window_bounds = array<i64: 9, 64, 128>}, {pipeline_mode = #tpu.pipeline_mode<synchronous>, transform_indices = @transform_3, window_bounds = array<i64: 1, 128>}, {pipeline_mode = #tpu.pipeline_mode<synchronous>, transform_indices = @transform_4, window_bounds = array<i64: 128, 128>}, {pipeline_mode = #tpu.pipeline_mode<synchronous>, transform_indices = @transform_5, window_bounds = array<i64: 1, 128>}, {transform_indices = @transform_6, window_bounds = array<i64: 8, 128>}]} {
    %c0 = arith.constant 0 : index
    %c0_0 = arith.constant 0 : index
    %c0_1 = arith.constant 0 : index
    %0 = vector.load %arg1[%c0, %c0_0, %c0_1] : memref<8x18x72xf32, #tpu.memory_space<vmem>>, vector<8x16x64xf32>
    %c0_2 = arith.constant 0 : index
    %c0_3 = arith.constant 0 : index
    %1 = vector.load %arg2[%c0_2, %c0_3] : memref<18x72xf32, #tpu.memory_space<vmem>>, vector<16x64xf32>
    %2 = vector.shape_cast %1 : vector<16x64xf32> to vector<1x16x64xf32>
    %3 = vector.broadcast %2 : vector<1x16x64xf32> to vector<8x16x64xf32>
    %4 = arith.mulf %0, %3 : vector<8x16x64xf32>
    %5 = arith.truncf %4 : vector<8x16x64xf32> to vector<8x16x64xbf16>
    %c0_4 = arith.constant 0 : index
    %c0_5 = arith.constant 0 : index
    %c0_6 = arith.constant 0 : index
    %6 = vector.load %arg3[%c0_4, %c0_5, %c0_6] : memref<9x64x128xbf16, #tpu.memory_space<vmem>>, vector<1x64x128xbf16>
    %7 = vector.shape_cast %6 : vector<1x64x128xbf16> to vector<64x128xbf16>
    "tpu.trace_start"() <{level = 10 : i32, message = "bhc,co->bho"}> : () -> ()
    %cst = arith.constant dense<0.000000e+00> : vector<8x16x128xf32>
    %8 = tpu.matmul %5, %7, %cst {dimension_numbers = #tpu.dot_dimension_numbers<[2], [0], [0, 1], [1], [0, 0, 0, 1, 1, 1], [], []>} : vector<8x16x64xbf16>, vector<64x128xbf16>, vector<8x16x128xf32> -> vector<8x16x128xf32>
    "tpu.trace_stop"() : () -> ()
    %c0_7 = arith.constant 0 : index
    %c0_8 = arith.constant 0 : index
    %c4 = arith.constant 4 : index
    %9 = vector.load %arg1[%c0_7, %c0_8, %c4] : memref<8x18x72xf32, #tpu.memory_space<vmem>>, vector<8x16x64xf32>
    %c0_9 = arith.constant 0 : index
    %c4_10 = arith.constant 4 : index
    %10 = vector.load %arg2[%c0_9, %c4_10] : memref<18x72xf32, #tpu.memory_space<vmem>>, vector<16x64xf32>
    %11 = vector.shape_cast %10 : vector<16x64xf32> to vector<1x16x64xf32>
    %12 = vector.broadcast %11 : vector<1x16x64xf32> to vector<8x16x64xf32>
    %13 = arith.mulf %9, %12 : vector<8x16x64xf32>
    %14 = arith.truncf %13 : vector<8x16x64xf32> to vector<8x16x64xbf16>
    %c1 = arith.constant 1 : index
    %c0_11 = arith.constant 0 : index
    %c0_12 = arith.constant 0 : index
    %15 = vector.load %arg3[%c1, %c0_11, %c0_12] : memref<9x64x128xbf16, #tpu.memory_space<vmem>>, vector<1x64x128xbf16>
    %16 = vector.shape_cast %15 : vector<1x64x128xbf16> to vector<64x128xbf16>
    "tpu.trace_start"() <{level = 10 : i32, message = "bhc,co->bho"}> : () -> ()
    %cst_13 = arith.constant dense<0.000000e+00> : vector<8x16x128xf32>
    %17 = tpu.matmul %14, %16, %cst_13 {dimension_numbers = #tpu.dot_dimension_numbers<[2], [0], [0, 1], [1], [0, 0, 0, 1, 1, 1], [], []>} : vector<8x16x64xbf16>, vector<64x128xbf16>, vector<8x16x128xf32> -> vector<8x16x128xf32>
    "tpu.trace_stop"() : () -> ()
    %18 = arith.addf %8, %17 : vector<8x16x128xf32>
    %c0_14 = arith.constant 0 : index
    %c0_15 = arith.constant 0 : index
    %c8 = arith.constant 8 : index
    %19 = vector.load %arg1[%c0_14, %c0_15, %c8] : memref<8x18x72xf32, #tpu.memory_space<vmem>>, vector<8x16x64xf32>
    %c0_16 = arith.constant 0 : index
    %c8_17 = arith.constant 8 : index
    %20 = vector.load %arg2[%c0_16, %c8_17] : memref<18x72xf32, #tpu.memory_space<vmem>>, vector<16x64xf32>
    %21 = vector.shape_cast %20 : vector<16x64xf32> to vector<1x16x64xf32>
    %22 = vector.broadcast %21 : vector<1x16x64xf32> to vector<8x16x64xf32>
    %23 = arith.mulf %19, %22 : vector<8x16x64xf32>
    %24 = arith.truncf %23 : vector<8x16x64xf32> to vector<8x16x64xbf16>
    %c2 = arith.constant 2 : index
    %c0_18 = arith.constant 0 : index
    %c0_19 = arith.constant 0 : index
    %25 = vector.load %arg3[%c2, %c0_18, %c0_19] : memref<9x64x128xbf16, #tpu.memory_space<vmem>>, vector<1x64x128xbf16>
    %26 = vector.shape_cast %25 : vector<1x64x128xbf16> to vector<64x128xbf16>
    "tpu.trace_start"() <{level = 10 : i32, message = "bhc,co->bho"}> : () -> ()
    %cst_20 = arith.constant dense<0.000000e+00> : vector<8x16x128xf32>
    %27 = tpu.matmul %24, %26, %cst_20 {dimension_numbers = #tpu.dot_dimension_numbers<[2], [0], [0, 1], [1], [0, 0, 0, 1, 1, 1], [], []>} : vector<8x16x64xbf16>, vector<64x128xbf16>, vector<8x16x128xf32> -> vector<8x16x128xf32>
    "tpu.trace_stop"() : () -> ()
    %28 = arith.addf %18, %27 : vector<8x16x128xf32>
    %c0_21 = arith.constant 0 : index
    %c1_22 = arith.constant 1 : index
    %c0_23 = arith.constant 0 : index
    %29 = vector.load %arg1[%c0_21, %c1_22, %c0_23] : memref<8x18x72xf32, #tpu.memory_space<vmem>>, vector<8x16x64xf32>
    %c1_24 = arith.constant 1 : index
    %c0_25 = arith.constant 0 : index
    %30 = vector.load %arg2[%c1_24, %c0_25] : memref<18x72xf32, #tpu.memory_space<vmem>>, vector<16x64xf32>
    %31 = vector.shape_cast %30 : vector<16x64xf32> to vector<1x16x64xf32>
    %32 = vector.broadcast %31 : vector<1x16x64xf32> to vector<8x16x64xf32>
    %33 = arith.mulf %29, %32 : vector<8x16x64xf32>
    %34 = arith.truncf %33 : vector<8x16x64xf32> to vector<8x16x64xbf16>
    %c3 = arith.constant 3 : index
    %c0_26 = arith.constant 0 : index
    %c0_27 = arith.constant 0 : index
    %35 = vector.load %arg3[%c3, %c0_26, %c0_27] : memref<9x64x128xbf16, #tpu.memory_space<vmem>>, vector<1x64x128xbf16>
    %36 = vector.shape_cast %35 : vector<1x64x128xbf16> to vector<64x128xbf16>
    "tpu.trace_start"() <{level = 10 : i32, message = "bhc,co->bho"}> : () -> ()
    %cst_28 = arith.constant dense<0.000000e+00> : vector<8x16x128xf32>
    %37 = tpu.matmul %34, %36, %cst_28 {dimension_numbers = #tpu.dot_dimension_numbers<[2], [0], [0, 1], [1], [0, 0, 0, 1, 1, 1], [], []>} : vector<8x16x64xbf16>, vector<64x128xbf16>, vector<8x16x128xf32> -> vector<8x16x128xf32>
    "tpu.trace_stop"() : () -> ()
    %38 = arith.addf %28, %37 : vector<8x16x128xf32>
    %c0_29 = arith.constant 0 : index
    %c1_30 = arith.constant 1 : index
    %c4_31 = arith.constant 4 : index
    %39 = vector.load %arg1[%c0_29, %c1_30, %c4_31] : memref<8x18x72xf32, #tpu.memory_space<vmem>>, vector<8x16x64xf32>
    %c1_32 = arith.constant 1 : index
    %c4_33 = arith.constant 4 : index
    %40 = vector.load %arg2[%c1_32, %c4_33] : memref<18x72xf32, #tpu.memory_space<vmem>>, vector<16x64xf32>
    %41 = vector.shape_cast %40 : vector<16x64xf32> to vector<1x16x64xf32>
    %42 = vector.broadcast %41 : vector<1x16x64xf32> to vector<8x16x64xf32>
    %43 = arith.mulf %39, %42 : vector<8x16x64xf32>
    %44 = arith.truncf %43 : vector<8x16x64xf32> to vector<8x16x64xbf16>
    %c4_34 = arith.constant 4 : index
    %c0_35 = arith.constant 0 : index
    %c0_36 = arith.constant 0 : index
    %45 = vector.load %arg3[%c4_34, %c0_35, %c0_36] : memref<9x64x128xbf16, #tpu.memory_space<vmem>>, vector<1x64x128xbf16>
    %46 = vector.shape_cast %45 : vector<1x64x128xbf16> to vector<64x128xbf16>
    "tpu.trace_start"() <{level = 10 : i32, message = "bhc,co->bho"}> : () -> ()
    %cst_37 = arith.constant dense<0.000000e+00> : vector<8x16x128xf32>
    %47 = tpu.matmul %44, %46, %cst_37 {dimension_numbers = #tpu.dot_dimension_numbers<[2], [0], [0, 1], [1], [0, 0, 0, 1, 1, 1], [], []>} : vector<8x16x64xbf16>, vector<64x128xbf16>, vector<8x16x128xf32> -> vector<8x16x128xf32>
    "tpu.trace_stop"() : () -> ()
    %48 = arith.addf %38, %47 : vector<8x16x128xf32>
    %c0_38 = arith.constant 0 : index
    %c1_39 = arith.constant 1 : index
    %c8_40 = arith.constant 8 : index
    %49 = vector.load %arg1[%c0_38, %c1_39, %c8_40] : memref<8x18x72xf32, #tpu.memory_space<vmem>>, vector<8x16x64xf32>
    %c1_41 = arith.constant 1 : index
    %c8_42 = arith.constant 8 : index
    %50 = vector.load %arg2[%c1_41, %c8_42] : memref<18x72xf32, #tpu.memory_space<vmem>>, vector<16x64xf32>
    %51 = vector.shape_cast %50 : vector<16x64xf32> to vector<1x16x64xf32>
    %52 = vector.broadcast %51 : vector<1x16x64xf32> to vector<8x16x64xf32>
    %53 = arith.mulf %49, %52 : vector<8x16x64xf32>
    %54 = arith.truncf %53 : vector<8x16x64xf32> to vector<8x16x64xbf16>
    %c5 = arith.constant 5 : index
    %c0_43 = arith.constant 0 : index
    %c0_44 = arith.constant 0 : index
    %55 = vector.load %arg3[%c5, %c0_43, %c0_44] : memref<9x64x128xbf16, #tpu.memory_space<vmem>>, vector<1x64x128xbf16>
    %56 = vector.shape_cast %55 : vector<1x64x128xbf16> to vector<64x128xbf16>
    "tpu.trace_start"() <{level = 10 : i32, message = "bhc,co->bho"}> : () -> ()
    %cst_45 = arith.constant dense<0.000000e+00> : vector<8x16x128xf32>
    %57 = tpu.matmul %54, %56, %cst_45 {dimension_numbers = #tpu.dot_dimension_numbers<[2], [0], [0, 1], [1], [0, 0, 0, 1, 1, 1], [], []>} : vector<8x16x64xbf16>, vector<64x128xbf16>, vector<8x16x128xf32> -> vector<8x16x128xf32>
    "tpu.trace_stop"() : () -> ()
    %58 = arith.addf %48, %57 : vector<8x16x128xf32>
    %c0_46 = arith.constant 0 : index
    %c2_47 = arith.constant 2 : index
    %c0_48 = arith.constant 0 : index
    %59 = vector.load %arg1[%c0_46, %c2_47, %c0_48] : memref<8x18x72xf32, #tpu.memory_space<vmem>>, vector<8x16x64xf32>
    %c2_49 = arith.constant 2 : index
    %c0_50 = arith.constant 0 : index
    %60 = vector.load %arg2[%c2_49, %c0_50] : memref<18x72xf32, #tpu.memory_space<vmem>>, vector<16x64xf32>
    %61 = vector.shape_cast %60 : vector<16x64xf32> to vector<1x16x64xf32>
    %62 = vector.broadcast %61 : vector<1x16x64xf32> to vector<8x16x64xf32>
    %63 = arith.mulf %59, %62 : vector<8x16x64xf32>
    %64 = arith.truncf %63 : vector<8x16x64xf32> to vector<8x16x64xbf16>
    %c6 = arith.constant 6 : index
    %c0_51 = arith.constant 0 : index
    %c0_52 = arith.constant 0 : index
    %65 = vector.load %arg3[%c6, %c0_51, %c0_52] : memref<9x64x128xbf16, #tpu.memory_space<vmem>>, vector<1x64x128xbf16>
    %66 = vector.shape_cast %65 : vector<1x64x128xbf16> to vector<64x128xbf16>
    "tpu.trace_start"() <{level = 10 : i32, message = "bhc,co->bho"}> : () -> ()
    %cst_53 = arith.constant dense<0.000000e+00> : vector<8x16x128xf32>
    %67 = tpu.matmul %64, %66, %cst_53 {dimension_numbers = #tpu.dot_dimension_numbers<[2], [0], [0, 1], [1], [0, 0, 0, 1, 1, 1], [], []>} : vector<8x16x64xbf16>, vector<64x128xbf16>, vector<8x16x128xf32> -> vector<8x16x128xf32>
    "tpu.trace_stop"() : () -> ()
    %68 = arith.addf %58, %67 : vector<8x16x128xf32>
    %c0_54 = arith.constant 0 : index
    %c2_55 = arith.constant 2 : index
    %c4_56 = arith.constant 4 : index
    %69 = vector.load %arg1[%c0_54, %c2_55, %c4_56] : memref<8x18x72xf32, #tpu.memory_space<vmem>>, vector<8x16x64xf32>
    %c2_57 = arith.constant 2 : index
    %c4_58 = arith.constant 4 : index
    %70 = vector.load %arg2[%c2_57, %c4_58] : memref<18x72xf32, #tpu.memory_space<vmem>>, vector<16x64xf32>
    %71 = vector.shape_cast %70 : vector<16x64xf32> to vector<1x16x64xf32>
    %72 = vector.broadcast %71 : vector<1x16x64xf32> to vector<8x16x64xf32>
    %73 = arith.mulf %69, %72 : vector<8x16x64xf32>
    %74 = arith.truncf %73 : vector<8x16x64xf32> to vector<8x16x64xbf16>
    %c7 = arith.constant 7 : index
    %c0_59 = arith.constant 0 : index
    %c0_60 = arith.constant 0 : index
    %75 = vector.load %arg3[%c7, %c0_59, %c0_60] : memref<9x64x128xbf16, #tpu.memory_space<vmem>>, vector<1x64x128xbf16>
    %76 = vector.shape_cast %75 : vector<1x64x128xbf16> to vector<64x128xbf16>
    "tpu.trace_start"() <{level = 10 : i32, message = "bhc,co->bho"}> : () -> ()
    %cst_61 = arith.constant dense<0.000000e+00> : vector<8x16x128xf32>
    %77 = tpu.matmul %74, %76, %cst_61 {dimension_numbers = #tpu.dot_dimension_numbers<[2], [0], [0, 1], [1], [0, 0, 0, 1, 1, 1], [], []>} : vector<8x16x64xbf16>, vector<64x128xbf16>, vector<8x16x128xf32> -> vector<8x16x128xf32>
    "tpu.trace_stop"() : () -> ()
    %78 = arith.addf %68, %77 : vector<8x16x128xf32>
    %c0_62 = arith.constant 0 : index
    %c2_63 = arith.constant 2 : index
    %c8_64 = arith.constant 8 : index
    %79 = vector.load %arg1[%c0_62, %c2_63, %c8_64] : memref<8x18x72xf32, #tpu.memory_space<vmem>>, vector<8x16x64xf32>
    %c2_65 = arith.constant 2 : index
    %c8_66 = arith.constant 8 : index
    %80 = vector.load %arg2[%c2_65, %c8_66] : memref<18x72xf32, #tpu.memory_space<vmem>>, vector<16x64xf32>
    %81 = vector.shape_cast %80 : vector<16x64xf32> to vector<1x16x64xf32>
    %82 = vector.broadcast %81 : vector<1x16x64xf32> to vector<8x16x64xf32>
    %83 = arith.mulf %79, %82 : vector<8x16x64xf32>
    %84 = arith.truncf %83 : vector<8x16x64xf32> to vector<8x16x64xbf16>
    %c8_67 = arith.constant 8 : index
    %c0_68 = arith.constant 0 : index
    %c0_69 = arith.constant 0 : index
    %85 = vector.load %arg3[%c8_67, %c0_68, %c0_69] : memref<9x64x128xbf16, #tpu.memory_space<vmem>>, vector<1x64x128xbf16>
    %86 = vector.shape_cast %85 : vector<1x64x128xbf16> to vector<64x128xbf16>
    "tpu.trace_start"() <{level = 10 : i32, message = "bhc,co->bho"}> : () -> ()
    %cst_70 = arith.constant dense<0.000000e+00> : vector<8x16x128xf32>
    %87 = tpu.matmul %84, %86, %cst_70 {dimension_numbers = #tpu.dot_dimension_numbers<[2], [0], [0, 1], [1], [0, 0, 0, 1, 1, 1], [], []>} : vector<8x16x64xbf16>, vector<64x128xbf16>, vector<8x16x128xf32> -> vector<8x16x128xf32>
    "tpu.trace_stop"() : () -> ()
    %88 = arith.addf %78, %87 : vector<8x16x128xf32>
    %c0_71 = arith.constant 0 : index
    %c0_72 = arith.constant 0 : index
    %89 = vector.load %arg4[%c0_71, %c0_72] : memref<1x128xf32, #tpu.memory_space<vmem>>, vector<1x128xf32>
    %90 = vector.shape_cast %89 : vector<1x128xf32> to vector<1x1x128xf32>
    %91 = vector.broadcast %90 : vector<1x1x128xf32> to vector<8x16x128xf32>
    %92 = arith.addf %88, %91 : vector<8x16x128xf32>
    %cst_73 = arith.constant 0.000000e+00 : f32
    %93 = vector.broadcast %cst_73 : f32 to vector<8x16x128xf32>
    %94 = arith.maximumf %92, %93 : vector<8x16x128xf32>
    %cst_74 = arith.constant dense<0.000000e+00> : vector<8x128xf32>
    %95 = vector.multi_reduction <add>, %94, %cst_74 [1] : vector<8x16x128xf32> to vector<8x128xf32>
    %c0_75 = arith.constant 0 : index
    %c0_76 = arith.constant 0 : index
    %96 = vector.load %arg5[%c0_75, %c0_76] : memref<128x128xf32, #tpu.memory_space<vmem>>, vector<128x128xf32>
    %cst_77 = arith.constant dense<0.000000e+00> : vector<8x128xf32>
    %97 = tpu.matmul %95, %96, %cst_77 {dimension_numbers = #tpu.dot_dimension_numbers<[1], [0], [0], [1], [0, 0, 1, 1], [], []>} : vector<8x128xf32>, vector<128x128xf32>, vector<8x128xf32> -> vector<8x128xf32>
    %c0_78 = arith.constant 0 : index
    %c0_79 = arith.constant 0 : index
    %98 = vector.load %arg6[%c0_78, %c0_79] : memref<1x128xf32, #tpu.memory_space<vmem>>, vector<1x128xf32>
    %99 = vector.broadcast %98 : vector<1x128xf32> to vector<8x128xf32>
    %100 = arith.addf %97, %99 : vector<8x128xf32>
    %c0_80 = arith.constant 0 : index
    %c0_81 = arith.constant 0 : index
    %101 = vector.load %arg7[%c0_80, %c0_81] : memref<8x128xf32, #tpu.memory_space<vmem>>, vector<8x128xf32>
    tpu.vector_store %arg7[%c0_80, %c0_81], %100 {strides = array<i32>} : memref<8x128xf32, #tpu.memory_space<vmem>>, vector<8x128xf32>,
    return
  }
  func.func @transform_0(%arg0: i32) -> (i32, i32, i32) {
    %c0_i32 = arith.constant 0 : i32
    %c0_i32_0 = arith.constant 0 : i32
    %c0_i32_1 = arith.constant 0 : i32
    return %arg0, %c0_i32, %c0_i32_0 : i32, i32, i32
  }
  func.func @transform_1(%arg0: i32) -> (i32, i32) {
    %c0_i32 = arith.constant 0 : i32
    %c0_i32_0 = arith.constant 0 : i32
    %c0_i32_1 = arith.constant 0 : i32
    return %c0_i32, %c0_i32_0 : i32, i32
  }
  func.func @transform_2(%arg0: i32) -> (i32, i32, i32) {
    %c0_i32 = arith.constant 0 : i32
    %c0_i32_0 = arith.constant 0 : i32
    %c0_i32_1 = arith.constant 0 : i32
    %c0_i32_2 = arith.constant 0 : i32
    return %c0_i32, %c0_i32_0, %c0_i32_1 : i32, i32, i32
  }
  func.func @transform_3(%arg0: i32) -> (i32, i32) {
    %c0_i32 = arith.constant 0 : i32
    %c0_i32_0 = arith.constant 0 : i32
    %c0_i32_1 = arith.constant 0 : i32
    return %c0_i32, %c0_i32_0 : i32, i32
  }
  func.func @transform_4(%arg0: i32) -> (i32, i32) {
    %c0_i32 = arith.constant 0 : i32
    %c0_i32_0 = arith.constant 0 : i32
    %c0_i32_1 = arith.constant 0 : i32
    return %c0_i32, %c0_i32_0 : i32, i32
  }
  func.func @transform_5(%arg0: i32) -> (i32, i32) {
    %c0_i32 = arith.constant 0 : i32
    %c0_i32_0 = arith.constant 0 : i32
    %c0_i32_1 = arith.constant 0 : i32
    return %c0_i32, %c0_i32_0 : i32, i32
  }
  func.func @transform_6(%arg0: i32) -> (i32, i32) {
    %c0_i32 = arith.constant 0 : i32
    %c0_i32_0 = arith.constant 0 : i32
    return %arg0, %c0_i32 : i32, i32
  }
}

</mosaic_0001>

<llo_original>
// kernel: tile.13
$region0: #{tile.13}
  #allocation0 [shape = 's32[1]{0}', space=sflag, size = 0x4, scoped, tag = 'scoped memory for tile.13']
  %s0 = inlined_call_operand.vmem [shape: f32[8], index: 0, kind: input, shape index: {}]
  %s1 = inlined_call_operand.vmem [shape: f32[16,8], index: 1, kind: output, shape index: {}]
  // Predicated region
  $region2: #{tile.13} parent=0 // pred_check
    _
  $region3: #{tile.13} parent=0 // pred_check_branch
    %3 = sbr.rel (0) target = $region5
  $region4: #{tile.13} parent=0 // pred_region
    _
  $region5: #{tile.13} parent=0 // pred_fallthru
    _
  %v4 = vld [vmem:[%s0] ss:$0 sm:$0xff]
  %5 = vst [vmem:[%s1] sm:$0xff] %v4
  %s6 = scalar_lea.vmem %s1, 8
  %7 = vst [vmem:[%s6] sm:$0xff] %v4

// kernel: tile.14
$region0: #{tile.14}
  %s0 = inlined_call_operand.vmem [shape: f32[16,8], index: 0, kind: input, shape index: {}]
  %s1 = inlined_call_operand.vmem [shape: f32[1,128], index: 1, kind: output, shape index: {}]
  $region1: #{tile.14} parent=0
    #allocation0 [shape = 'u8[4096]{0}', space=vmem, size = 0x1000, scoped, tag = 'scoped mem for output reshape']
    %v2 = vld [vmem:[%s0] sm:$0x1]
    %vm3 = vcmask 64512
    %4 = vst.msk [vmem:[#allocation0] sm:$0x1] %vm3, %v2
    %s5 = scalar_lea.vmem %s0, 15
    %v6 = vld [vmem:[%s5] sm:$0x1]
    %7 = vrot.lane.b32.xlu0 %v6, 120
    %v8 = vpop.permute.xlu0 %7
    %vm9 = vcmask 1048512
    %10 = vst.msk [vmem:[#allocation0] sm:$0x1] %vm9, %v8
    %s11 = scalar_lea.vmem %s0, 14
    %v12 = vld [vmem:[%s11] sm:$0x1]
    %13 = vrot.lane.b32.xlu0 %v12, 112
    %v14 = vpop.permute.xlu0 %13
    %vm15 = vcmask 982912
    %16 = vst.msk [vmem:[#allocation0] sm:$0x1] %vm15, %v14
    %s17 = scalar_lea.vmem %s0, 13
    %v18 = vld [vmem:[%s17] sm:$0x1]
    %19 = vrot.lane.b32.xlu0 %v18, 104
    %v20 = vpop.permute.xlu0 %19
    %vm21 = vcmask 917312
    %22 = vst.msk [vmem:[#allocation0] sm:$0x1] %vm21, %v20
    %s23 = scalar_lea.vmem %s0, 12
    %v24 = vld [vmem:[%s23] sm:$0x1]
    %25 = vrot.lane.b32.xlu0 %v24, 96
    %v26 = vpop.permute.xlu0 %25
    %vm27 = vcmask 851712
    %28 = vst.msk [vmem:[#allocation0] sm:$0x1] %vm27, %v26
    %s29 = scalar_lea.vmem %s0, 11
    %v30 = vld [vmem:[%s29] sm:$0x1]
    %31 = vrot.lane.b32.xlu0 %v30, 88
    %v32 = vpop.permute.xlu0 %31
    %vm33 = vcmask 786112
    %34 = vst.msk [vmem:[#allocation0] sm:$0x1] %vm33, %v32
    %s35 = scalar_lea.vmem %s0, 10
    %v36 = vld [vmem:[%s35] sm:$0x1]
    %37 = vrot.lane.b32.xlu0 %v36, 80
    %v38 = vpop.permute.xlu0 %37
    %vm39 = vcmask 720512
    %40 = vst.msk [vmem:[#allocation0] sm:$0x1] %vm39, %v38
    %s41 = scalar_lea.vmem %s0, 9
    %v42 = vld [vmem:[%s41] sm:$0x1]
    %43 = vrot.lane.b32.xlu0 %v42, 72
    %v44 = vpop.permute.xlu0 %43
    %vm45 = vcmask 654912
    %46 = vst.msk [vmem:[#allocation0] sm:$0x1] %vm45, %v44
    %s47 = scalar_lea.vmem %s0, 8
    %v48 = vld [vmem:[%s47] sm:$0x1]
    %49 = vrot.lane.b32.xlu0 %v48, 64
    %v50 = vpop.permute.xlu0 %49
    %vm51 = vcmask 589312
    %52 = vst.msk [vmem:[#allocation0] sm:$0x1] %vm51, %v50
    %s53 = scalar_lea.vmem %s0, 7
    %v54 = vld [vmem:[%s53] sm:$0x1]
    %55 = vrot.lane.b32.xlu0 %v54, 56
    %v56 = vpop.permute.xlu0 %55
    %vm57 = vcmask 523712
    %58 = vst.msk [vmem:[#allocation0] sm:$0x1] %vm57, %v56
    %s59 = scalar_lea.vmem %s0, 6
    %v60 = vld [vmem:[%s59] sm:$0x1]
    %61 = vrot.lane.b32.xlu0 %v60, 48
    %v62 = vpop.permute.xlu0 %61
    %vm63 = vcmask 458112
    %64 = vst.msk [vmem:[#allocation0] sm:$0x1] %vm63, %v62
    %s65 = scalar_lea.vmem %s0, 5
    %v66 = vld [vmem:[%s65] sm:$0x1]
    %67 = vrot.lane.b32.xlu0 %v66, 40
    %v68 = vpop.permute.xlu0 %67
    %vm69 = vcmask 392512
    %70 = vst.msk [vmem:[#allocation0] sm:$0x1] %vm69, %v68
    %s71 = scalar_lea.vmem %s0, 4
    %v72 = vld [vmem:[%s71] sm:$0x1]
    %73 = vrot.lane.b32.xlu0 %v72, 32
    %v74 = vpop.permute.xlu0 %73
    %vm75 = vcmask 326912
    %76 = vst.msk [vmem:[#allocation0] sm:$0x1] %vm75, %v74
    %s77 = scalar_lea.vmem %s0, 3
    %v78 = vld [vmem:[%s77] sm:$0x1]
    %79 = vrot.lane.b32.xlu0 %v78, 24
    %v80 = vpop.permute.xlu0 %79
    %vm81 = vcmask 261312
    %82 = vst.msk [vmem:[#allocation0] sm:$0x1] %vm81, %v80
    %s83 = scalar_lea.vmem %s0, 2
    %v84 = vld [vmem:[%s83] sm:$0x1]
    %85 = vrot.lane.b32.xlu0 %v84, 16
    %v86 = vpop.permute.xlu0 %85
    %vm87 = vcmask 195712
    %88 = vst.msk [vmem:[#allocation0] sm:$0x1] %vm87, %v86
    %s89 = scalar_lea.vmem %s0, 1
    %v90 = vld [vmem:[%s89] sm:$0x1]
    %91 = vrot.lane.b32.xlu0 %v90, 8
    %v92 = vpop.permute.xlu0 %91
    %vm93 = vcmask 130112
    %94 = vst.msk [vmem:[#allocation0] sm:$0x1] %vm93, %v92
    %s96 = sshllo.u32 0, 1
    %v98 = vld [vmem:[#allocation0] sm:%s96]
    %s99 = sshllo.u32 0, 1
    %100 = vst [vmem:[%s1] sm:%s99] %v98

// kernel: masked_model_forward.1
$region0: #{masked_model_forward.1}
  #allocation0 [shape = 'u32[]', space=smem, size = 0x4, offset = 0x4, fixed_abs, tag = 'smem constant byte address 0x4 - core index']
  #allocation1 [shape = 'u32[144,128]{1,0:T(1,128)}', space=vmem, size = 0x12000, scoped, tag = 'internal scratch']
  %s0 = inlined_call_operand.vmem [shape: f32[8,18,72], index: 0, kind: input, shape index: {}]
  %s1 = inlined_call_operand.vmem [shape: f32[18,72], index: 1, kind: input, shape index: {}]
  %s2 = inlined_call_operand.vmem [shape: bf16[9,64,128], index: 2, kind: input, shape index: {}]
  %s3 = inlined_call_operand.vmem [shape: f32[1,128], index: 3, kind: input, shape index: {}]
  %s4 = inlined_call_operand.vmem [shape: f32[128,128], index: 4, kind: input, shape index: {}]
  %s5 = inlined_call_operand.vmem [shape: f32[1,128], index: 5, kind: input, shape index: {}]
  %s6 = inlined_call_operand.vmem [shape: f32[8,128], index: 6, kind: output, shape index: {}]
  %s7 = sld [smem:[#allocation0]]
  $region34: #{masked_model_forward.1} parent=0
    _
  %s9 = ssub.s32 1, %s7
  %s10 = scalar_select 0, %s9, %s7
  // Predicated region
  $region2: #{masked_model_forward.1} parent=0 // pred_check
    _
  $region3: #{masked_model_forward.1} parent=0 // pred_check_branch
    %12 = sbr.rel (0) target = $region5
  $region4: #{masked_model_forward.1} parent=0 // pred_region
    _
  $region5: #{masked_model_forward.1} parent=0 // pred_fallthru
    _
  // Predicated region
  $region6: #{masked_model_forward.1} parent=0 // pred_check
    _
  $region7: #{masked_model_forward.1} parent=0 // pred_check_branch
    %14 = sbr.rel (0) target = $region9
  $region8: #{masked_model_forward.1} parent=0 // pred_region
    _
  $region9: #{masked_model_forward.1} parent=0 // pred_fallthru
    _
  // Predicated region
  $region10: #{masked_model_forward.1} parent=0 // pred_check
    _
  $region11: #{masked_model_forward.1} parent=0 // pred_check_branch
    %16 = sbr.rel (0) target = $region13
  $region12: #{masked_model_forward.1} parent=0 // pred_region
    _
  $region13: #{masked_model_forward.1} parent=0 // pred_fallthru
    _
  // Predicated region
  $region14: #{masked_model_forward.1} parent=0 // pred_check
    _
  $region15: #{masked_model_forward.1} parent=0 // pred_check_branch
    %18 = sbr.rel (0) target = $region17
  $region16: #{masked_model_forward.1} parent=0 // pred_region
    _
  $region17: #{masked_model_forward.1} parent=0 // pred_fallthru
    _
  // Predicated region
  $region18: #{masked_model_forward.1} parent=0 // pred_check
    _
  $region19: #{masked_model_forward.1} parent=0 // pred_check_branch
    %20 = sbr.rel (0) target = $region21
  $region20: #{masked_model_forward.1} parent=0 // pred_region
    _
  $region21: #{masked_model_forward.1} parent=0 // pred_fallthru
    _
  // Predicated region
  $region22: #{masked_model_forward.1} parent=0 // pred_check
    _
  $region23: #{masked_model_forward.1} parent=0 // pred_check_branch
    %22 = sbr.rel (0) target = $region25
  $region24: #{masked_model_forward.1} parent=0 // pred_region
    _
  $region25: #{masked_model_forward.1} parent=0 // pred_fallthru
    _
  %v24 = vld [vmem:[%s0] sm:$0xff]
  %v25 = vld [vmem:[%s0 + $0x8] sm:$0xff]
  %v26 = vld [vmem:[%s0 + $0x18] sm:$0xff]
  %v27 = vld [vmem:[%s0 + $0x20] sm:$0xff]
  %v28 = vld [vmem:[%s0 + $0x30] sm:$0xff]
  %v29 = vld [vmem:[%s0 + $0x38] sm:$0xff]
  %v30 = vld [vmem:[%s0 + $0x48] sm:$0xff]
  %v31 = vld [vmem:[%s0 + $0x50] sm:$0xff]
  %v32 = vld [vmem:[%s0 + $0x60] sm:$0xff]
  %v33 = vld [vmem:[%s0 + $0x68] sm:$0xff]
  %v34 = vld [vmem:[%s0 + $0x78] sm:$0xff]
  %v35 = vld [vmem:[%s0 + $0x80] sm:$0xff]
  %v36 = vld [vmem:[%s0 + $0x90] sm:$0xff]
  %v37 = vld [vmem:[%s0 + $0x98] sm:$0xff]
  %v38 = vld [vmem:[%s0 + $0xa8] sm:$0xff]
  %v39 = vld [vmem:[%s0 + $0xb0] sm:$0xff]
  %v40 = vld [vmem:[%s1] sm:$0xff]
  %v41 = vld [vmem:[%s1 + $0x8] sm:$0xff]
  %v42 = vmul.f32 %v24, %v40
  %v43 = vmul.f32 %v25, %v41
  %v44 = vmul.f32 %v26, %v40
  %v45 = vmul.f32 %v27, %v41
  %v46 = vmul.f32 %v28, %v40
  %v47 = vmul.f32 %v29, %v41
  %v48 = vmul.f32 %v30, %v40
  %v49 = vmul.f32 %v31, %v41
  %v50 = vmul.f32 %v32, %v40
  %v51 = vmul.f32 %v33, %v41
  %v52 = vmul.f32 %v34, %v40
  %v53 = vmul.f32 %v35, %v41
  %v54 = vmul.f32 %v36, %v40
  %v55 = vmul.f32 %v37, %v41
  %v56 = vmul.f32 %v38, %v40
  %v57 = vmul.f32 %v39, %v41
  %v58 = vpack.c.bf16 %v43, %v42
  %v59 = vpack.c.bf16 %v45, %v44
  %v60 = vpack.c.bf16 %v47, %v46
  %v61 = vpack.c.bf16 %v49, %v48
  %v62 = vpack.c.bf16 %v51, %v50
  %v63 = vpack.c.bf16 %v53, %v52
  %v64 = vpack.c.bf16 %v55, %v54
  %v65 = vpack.c.bf16 %v57, %v56
  %v66 = vld [vmem:[%s2] sm:$0xf]
  %v67 = vld [vmem:[%s2 + $0x4] sm:$0xf]
  %v68 = vld [vmem:[%s2 + $0x8] sm:$0xf]
  %v69 = vld [vmem:[%s2 + $0xc] sm:$0xf]
  %v70 = vld [vmem:[%s2 + $0x10] sm:$0xf]
  %v71 = vld [vmem:[%s2 + $0x14] sm:$0xf]
  %v72 = vld [vmem:[%s2 + $0x18] sm:$0xf]
  %v73 = vld [vmem:[%s2 + $0x1c] sm:$0xf]
  %v74 = vld [vmem:[%s0] sm:$0xff]
  %v75 = vld [vmem:[%s0 + $0x8] sm:$0xff]
  %v76 = vld [vmem:[%s0 + $0x18] sm:$0xff]
  %v77 = vld [vmem:[%s0 + $0x20] sm:$0xff]
  %v78 = vld [vmem:[%s0 + $0x30] sm:$0xff]
  %v79 = vld [vmem:[%s0 + $0x38] sm:$0xff]
  %v80 = vld [vmem:[%s0 + $0x48] sm:$0xff]
  %v81 = vld [vmem:[%s0 + $0x50] sm:$0xff]
  %v82 = vld [vmem:[%s0 + $0x60] sm:$0xff]
  %v83 = vld [vmem:[%s0 + $0x68] sm:$0xff]
  %v84 = vld [vmem:[%s0 + $0x78] sm:$0xff]
  %v85 = vld [vmem:[%s0 + $0x80] sm:$0xff]
  %v86 = vld [vmem:[%s0 + $0x90] sm:$0xff]
  %v87 = vld [vmem:[%s0 + $0x98] sm:$0xff]
  %v88 = vld [vmem:[%s0 + $0xa8] sm:$0xff]
  %v89 = vld [vmem:[%s0 + $0xb0] sm:$0xff]
  %v90 = vld [vmem:[%s1] sm:$0xff]
  %v91 = vld [vmem:[%s1 + $0x8] sm:$0xff]
  %v92 = vmul.f32 %v74, %v90
  %v93 = vmul.f32 %v75, %v91
  %v94 = vmul.f32 %v76, %v90
  %v95 = vmul.f32 %v77, %v91
  %v96 = vmul.f32 %v78, %v90
  %v97 = vmul.f32 %v79, %v91
  %v98 = vmul.f32 %v80, %v90
  %v99 = vmul.f32 %v81, %v91
  %v100 = vmul.f32 %v82, %v90
  %v101 = vmul.f32 %v83, %v91
  %v102 = vmul.f32 %v84, %v90
  %v103 = vmul.f32 %v85, %v91
  %v104 = vmul.f32 %v86, %v90
  %v105 = vmul.f32 %v87, %v91
  %v106 = vmul.f32 %v88, %v90
  %v107 = vmul.f32 %v89, %v91
  %v108 = vpack.c.bf16 %v93, %v92
  %v109 = vpack.c.bf16 %v95, %v94
  %v110 = vpack.c.bf16 %v97, %v96
  %v111 = vpack.c.bf16 %v99, %v98
  %v112 = vpack.c.bf16 %v101, %v100
  %v113 = vpack.c.bf16 %v103, %v102
  %v114 = vpack.c.bf16 %v105, %v104
  %v115 = vpack.c.bf16 %v107, %v106
  %s116 = scalar_lea.vmem %s2, 32
  %v117 = vld [vmem:[%s116] sm:$0xf]
  %v118 = vld [vmem:[%s116 + $0x4] sm:$0xf]
  %v119 = vld [vmem:[%s116 + $0x8] sm:$0xf]
  %v120 = vld [vmem:[%s116 + $0xc] sm:$0xf]
  %v121 = vld [vmem:[%s116 + $0x10] sm:$0xf]
  %v122 = vld [vmem:[%s116 + $0x14] sm:$0xf]
  %v123 = vld [vmem:[%s116 + $0x18] sm:$0xf]
  %v124 = vld [vmem:[%s116 + $0x1c] sm:$0xf]
  %133 = vrot.lane.b32.xlu0 %v108, 124
  %v134 = vpop.permute.xlu0 %133
  %135 = vrot.lane.b32.xlu0 %v109, 124
  %v136 = vpop.permute.xlu0 %135
  %137 = vrot.lane.b32.xlu0 %v110, 124
  %v138 = vpop.permute.xlu0 %137
  %139 = vrot.lane.b32.xlu0 %v111, 124
  %v140 = vpop.permute.xlu0 %139
  %141 = vrot.lane.b32.xlu0 %v112, 124
  %v142 = vpop.permute.xlu0 %141
  %143 = vrot.lane.b32.xlu0 %v113, 124
  %v144 = vpop.permute.xlu0 %143
  %145 = vrot.lane.b32.xlu0 %v114, 124
  %v146 = vpop.permute.xlu0 %145
  %147 = vrot.lane.b32.xlu0 %v115, 124
  %v148 = vpop.permute.xlu0 %147
  %v157 = vunpack.c.l.b16 %v117
  %v158 = vunpack.c.l.b16 %v118
  %v159 = vunpack.c.l.b16 %v119
  %v160 = vunpack.c.l.b16 %v120
  %v161 = vunpack.c.l.b16 %v121
  %v162 = vunpack.c.l.b16 %v122
  %v163 = vunpack.c.l.b16 %v123
  %v164 = vunpack.c.l.b16 %v124
  %v165 = vpack.c.b16 %v158, %v157
  %v166 = vpack.c.b16 %v160, %v159
  %v167 = vpack.c.b16 %v162, %v161
  %v168 = vpack.c.b16 %v164, %v163
  %vm173 = vcmask 523264
  %v175 = vsel %vm173, %v134, 0
  %v178 = vsel %vm173, %v136, 0
  %v181 = vsel %vm173, %v138, 0
  %v184 = vsel %vm173, %v140, 0
  %v187 = vsel %vm173, %v142, 0
  %v190 = vsel %vm173, %v144, 0
  %v193 = vsel %vm173, %v146, 0
  %v196 = vsel %vm173, %v148, 0
  %198 = vmatprep.subr.bf16.mxu0 0
  %199 = vmatpush1.bf16.msra.mxu0 %v165
  %200 = vmatprep.subr.bf16.mxu0 0
  %201 = vmatpush1.bf16.msra.mxu0 %v166
  %202 = vmatprep.subr.bf16.mxu0 0
  %203 = vmatpush1.bf16.msra.mxu0 %v167
  %204 = vmatprep.subr.bf16.mxu0 0
  %205 = vmatpush1.bf16.msra.mxu0 %v168
  %206 = vmatprep.subr.bf16.mxu0 0
  %207 = vmatpush1.bf16.msra.mxu0 0
  %208 = vmatprep.subr.bf16.mxu0 0
  %209 = vmatpush1.bf16.msra.mxu0 0
  %210 = vmatprep.subr.bf16.mxu0 0
  %211 = vmatpush1.bf16.msra.mxu0 0
  %212 = vmatprep.subr.bf16.mxu0 0
  %213 = vmatpush1.bf16.msra.mxu0 0
  %214 = vmatprep.subr.bf16.mxu0 0
  %215 = vmatpush1.bf16.msra.mxu0 0
  %216 = vmatprep.subr.bf16.mxu0 0
  %217 = vmatpush1.bf16.msra.mxu0 0
  %218 = vmatprep.subr.bf16.mxu0 0
  %219 = vmatpush1.bf16.msra.mxu0 0
  %220 = vmatprep.subr.bf16.mxu0 0
  %221 = vmatpush1.bf16.msra.mxu0 0
  %222 = vmatprep.subr.bf16.mxu0 0
  %223 = vmatpush1.bf16.msra.mxu0 0
  %224 = vmatprep.subr.bf16.mxu0 0
  %225 = vmatpush1.bf16.msra.mxu0 0
  %226 = vmatprep.subr.bf16.mxu0 0
  %227 = vmatpush1.bf16.msra.mxu0 0
  %228 = vmatprep.subr.bf16.mxu0 0
  %229 = vmatpush1.bf16.msra.mxu0 0
  %230 = vmatprep.mubr.bf16.mxu0 0
  %231 = vmatmul.mubr.bf16.gmra.mrb[0].mxu0 %v175
  %v232 = vpop.f32.mrb[0].mxu0
  %v233 = vadd.f32 0.0, %v232
  %v234 = vpop.f32.mrb[0].mxu0
  %v235 = vpop.f32.mrb[0].mxu0
  %v236 = vadd.f32 0.0, %v235
  %v237 = vpop.f32.mrb[0].mxu0
  %238 = vmatprep.mubr.bf16.mxu0 0
  %239 = vmatmul.mubr.bf16.gmra.mrb[0].mxu0 %v178
  %v240 = vpop.f32.mrb[0].mxu0
  %v241 = vadd.f32 0.0, %v240
  %v242 = vpop.f32.mrb[0].mxu0
  %v243 = vpop.f32.mrb[0].mxu0
  %v244 = vadd.f32 0.0, %v243
  %v245 = vpop.f32.mrb[0].mxu0
  %246 = vmatprep.mubr.bf16.mxu0 0
  %247 = vmatmul.mubr.bf16.gmra.mrb[0].mxu0 %v181
  %v248 = vpop.f32.mrb[0].mxu0
  %v249 = vadd.f32 0.0, %v248
  %v250 = vpop.f32.mrb[0].mxu0
  %v251 = vpop.f32.mrb[0].mxu0
  %v252 = vadd.f32 0.0, %v251
  %v253 = vpop.f32.mrb[0].mxu0
  %254 = vmatprep.mubr.bf16.mxu0 0
  %255 = vmatmul.mubr.bf16.gmra.mrb[0].mxu0 %v184
  %v256 = vpop.f32.mrb[0].mxu0
  %v257 = vadd.f32 0.0, %v256
  %v258 = vpop.f32.mrb[0].mxu0
  %v259 = vpop.f32.mrb[0].mxu0
  %v260 = vadd.f32 0.0, %v259
  %v261 = vpop.f32.mrb[0].mxu0
  %262 = vmatprep.mubr.bf16.mxu0 0
  %263 = vmatmul.mubr.bf16.gmra.mrb[0].mxu0 %v187
  %v264 = vpop.f32.mrb[0].mxu0
  %v265 = vadd.f32 0.0, %v264
  %v266 = vpop.f32.mrb[0].mxu0
  %v267 = vpop.f32.mrb[0].mxu0
  %v268 = vadd.f32 0.0, %v267
  %v269 = vpop.f32.mrb[0].mxu0
  %270 = vmatprep.mubr.bf16.mxu0 0
  %271 = vmatmul.mubr.bf16.gmra.mrb[0].mxu0 %v190
  %v272 = vpop.f32.mrb[0].mxu0
  %v273 = vadd.f32 0.0, %v272
  %v274 = vpop.f32.mrb[0].mxu0
  %v275 = vpop.f32.mrb[0].mxu0
  %v276 = vadd.f32 0.0, %v275
  %v277 = vpop.f32.mrb[0].mxu0
  %278 = vmatprep.mubr.bf16.mxu0 0
  %279 = vmatmul.mubr.bf16.gmra.mrb[0].mxu0 %v193
  %v280 = vpop.f32.mrb[0].mxu0
  %v281 = vadd.f32 0.0, %v280
  %v282 = vpop.f32.mrb[0].mxu0
  %v283 = vpop.f32.mrb[0].mxu0
  %v284 = vadd.f32 0.0, %v283
  %v285 = vpop.f32.mrb[0].mxu0
  %286 = vmatprep.mubr.bf16.mxu0 0
  %287 = vmatmul.mubr.bf16.gmra.mrb[0].mxu0 %v196
  %v288 = vpop.f32.mrb[0].mxu0
  %v289 = vadd.f32 0.0, %v288
  %v290 = vpop.f32.mrb[0].mxu0
  %v291 = vpop.f32.mrb[0].mxu0
  %v292 = vadd.f32 0.0, %v291
  %v293 = vpop.f32.mrb[0].mxu0
  %294 = vdwg.mxu0
  %v303 = vunpack.c.l.b16 %v66
  %v304 = vunpack.c.l.b16 %v67
  %v305 = vunpack.c.l.b16 %v68
  %v306 = vunpack.c.l.b16 %v69
  %v307 = vunpack.c.l.b16 %v70
  %v308 = vunpack.c.l.b16 %v71
  %v309 = vunpack.c.l.b16 %v72
  %v310 = vunpack.c.l.b16 %v73
  %v311 = vpack.c.b16 %v304, %v303
  %v312 = vpack.c.b16 %v306, %v305
  %v313 = vpack.c.b16 %v308, %v307
  %v314 = vpack.c.b16 %v310, %v309
  %v320 = vsel %vm173, %v58, 0
  %v323 = vsel %vm173, %v59, 0
  %v326 = vsel %vm173, %v60, 0
  %v329 = vsel %vm173, %v61, 0
  %v332 = vsel %vm173, %v62, 0
  %v335 = vsel %vm173, %v63, 0
  %v338 = vsel %vm173, %v64, 0
  %v341 = vsel %vm173, %v65, 0
  %343 = vmatprep.subr.bf16.mxu0 0
  %344 = vmatpush1.bf16.msra.mxu0 %v311
  %345 = vmatprep.subr.bf16.mxu0 0
  %346 = vmatpush1.bf16.msra.mxu0 %v312
  %347 = vmatprep.subr.bf16.mxu0 0
  %348 = vmatpush1.bf16.msra.mxu0 %v313
  %349 = vmatprep.subr.bf16.mxu0 0
  %350 = vmatpush1.bf16.msra.mxu0 %v314
  %351 = vmatprep.subr.bf16.mxu0 0
  %352 = vmatpush1.bf16.msra.mxu0 0
  %353 = vmatprep.subr.bf16.mxu0 0
  %354 = vmatpush1.bf16.msra.mxu0 0
  %355 = vmatprep.subr.bf16.mxu0 0
  %356 = vmatpush1.bf16.msra.mxu0 0
  %357 = vmatprep.subr.bf16.mxu0 0
  %358 = vmatpush1.bf16.msra.mxu0 0
  %359 = vmatprep.subr.bf16.mxu0 0
  %360 = vmatpush1.bf16.msra.mxu0 0
  %361 = vmatprep.subr.bf16.mxu0 0
  %362 = vmatpush1.bf16.msra.mxu0 0
  %363 = vmatprep.subr.bf16.mxu0 0
  %364 = vmatpush1.bf16.msra.mxu0 0
  %365 = vmatprep.subr.bf16.mxu0 0
  %366 = vmatpush1.bf16.msra.mxu0 0
  %367 = vmatprep.subr.bf16.mxu0 0
  %368 = vmatpush1.bf16.msra.mxu0 0
  %369 = vmatprep.subr.bf16.mxu0 0
  %370 = vmatpush1.bf16.msra.mxu0 0
  %371 = vmatprep.subr.bf16.mxu0 0
  %372 = vmatpush1.bf16.msra.mxu0 0
  %373 = vmatprep.subr.bf16.mxu0 0
  %374 = vmatpush1.bf16.msra.mxu0 0
  %375 = vmatprep.mubr.bf16.mxu0 0
  %376 = vmatmul.mubr.bf16.gmra.mrb[0].mxu0 %v320
  %v377 = vpop.f32.mrb[0].mxu0
  %v378 = vadd.f32 %v233, %v377
  %v379 = vpop.f32.mrb[0].mxu0
  %v380 = vpop.f32.mrb[0].mxu0
  %v381 = vadd.f32 %v236, %v380
  %v382 = vpop.f32.mrb[0].mxu0
  %383 = vmatprep.mubr.bf16.mxu0 0
  %384 = vmatmul.mubr.bf16.gmra.mrb[0].mxu0 %v323
  %v385 = vpop.f32.mrb[0].mxu0
  %v386 = vadd.f32 %v241, %v385
  %v387 = vpop.f32.mrb[0].mxu0
  %v388 = vpop.f32.mrb[0].mxu0
  %v389 = vadd.f32 %v244, %v388
  %v390 = vpop.f32.mrb[0].mxu0
  %391 = vmatprep.mubr.bf16.mxu0 0
  %392 = vmatmul.mubr.bf16.gmra.mrb[0].mxu0 %v326
  %v393 = vpop.f32.mrb[0].mxu0
  %v394 = vadd.f32 %v249, %v393
  %v395 = vpop.f32.mrb[0].mxu0
  %v396 = vpop.f32.mrb[0].mxu0
  %v397 = vadd.f32 %v252, %v396
  %v398 = vpop.f32.mrb[0].mxu0
  %399 = vmatprep.mubr.bf16.mxu0 0
  %400 = vmatmul.mubr.bf16.gmra.mrb[0].mxu0 %v329
  %v401 = vpop.f32.mrb[0].mxu0
  %v402 = vadd.f32 %v257, %v401
  %v403 = vpop.f32.mrb[0].mxu0
  %v404 = vpop.f32.mrb[0].mxu0
  %v405 = vadd.f32 %v260, %v404
  %v406 = vpop.f32.mrb[0].mxu0
  %407 = vmatprep.mubr.bf16.mxu0 0
  %408 = vmatmul.mubr.bf16.gmra.mrb[0].mxu0 %v332
  %v409 = vpop.f32.mrb[0].mxu0
  %v410 = vadd.f32 %v265, %v409
  %v411 = vpop.f32.mrb[0].mxu0
  %v412 = vpop.f32.mrb[0].mxu0
  %v413 = vadd.f32 %v268, %v412
  %v414 = vpop.f32.mrb[0].mxu0
  %415 = vmatprep.mubr.bf16.mxu0 0
  %416 = vmatmul.mubr.bf16.gmra.mrb[0].mxu0 %v335
  %v417 = vpop.f32.mrb[0].mxu0
  %v418 = vadd.f32 %v273, %v417
  %v419 = vpop.f32.mrb[0].mxu0
  %v420 = vpop.f32.mrb[0].mxu0
  %v421 = vadd.f32 %v276, %v420
  %v422 = vpop.f32.mrb[0].mxu0
  %423 = vmatprep.mubr.bf16.mxu0 0
  %424 = vmatmul.mubr.bf16.gmra.mrb[0].mxu0 %v338
  %v425 = vpop.f32.mrb[0].mxu0
  %v426 = vadd.f32 %v281, %v425
  %v427 = vpop.f32.mrb[0].mxu0
  %v428 = vpop.f32.mrb[0].mxu0
  %v429 = vadd.f32 %v284, %v428
  %v430 = vpop.f32.mrb[0].mxu0
  %431 = vmatprep.mubr.bf16.mxu0 0
  %432 = vmatmul.mubr.bf16.gmra.mrb[0].mxu0 %v341
  %v433 = vpop.f32.mrb[0].mxu0
  %v434 = vadd.f32 %v289, %v433
  %v435 = vpop.f32.mrb[0].mxu0
  %v436 = vpop.f32.mrb[0].mxu0
  %v437 = vadd.f32 %v292, %v436
  %v438 = vpop.f32.mrb[0].mxu0
  %439 = vdwg.mxu0
  %v440 = vld [vmem:[%s0] sm:$0xff]
  %v441 = vld [vmem:[%s0 + $0x8] sm:$0xff]
  %v442 = vld [vmem:[%s0 + $0x18] sm:$0xff]
  %v443 = vld [vmem:[%s0 + $0x20] sm:$0xff]
  %v444 = vld [vmem:[%s0 + $0x30] sm:$0xff]
  %v445 = vld [vmem:[%s0 + $0x38] sm:$0xff]
  %v446 = vld [vmem:[%s0 + $0x48] sm:$0xff]
  %v447 = vld [vmem:[%s0 + $0x50] sm:$0xff]
  %v448 = vld [vmem:[%s0 + $0x60] sm:$0xff]
  %v449 = vld [vmem:[%s0 + $0x68] sm:$0xff]
  %v450 = vld [vmem:[%s0 + $0x78] sm:$0xff]
  %v451 = vld [vmem:[%s0 + $0x80] sm:$0xff]
  %v452 = vld [vmem:[%s0 + $0x90] sm:$0xff]
  %v453 = vld [vmem:[%s0 + $0x98] sm:$0xff]
  %v454 = vld [vmem:[%s0 + $0xa8] sm:$0xff]
  %v455 = vld [vmem:[%s0 + $0xb0] sm:$0xff]
  %v456 = vld [vmem:[%s1] sm:$0xff]
  %v457 = vld [vmem:[%s1 + $0x8] sm:$0xff]
  %v458 = vmul.f32 %v440, %v456
  %v459 = vmul.f32 %v441, %v457
  %v460 = vmul.f32 %v442, %v456
  %v461 = vmul.f32 %v443, %v457
  %v462 = vmul.f32 %v444, %v456
  %v463 = vmul.f32 %v445, %v457
  %v464 = vmul.f32 %v446, %v456
  %v465 = vmul.f32 %v447, %v457
  %v466 = vmul.f32 %v448, %v456
  %v467 = vmul.f32 %v449, %v457
  %v468 = vmul.f32 %v450, %v456
  %v469 = vmul.f32 %v451, %v457
  %v470 = vmul.f32 %v452, %v456
  %v471 = vmul.f32 %v453, %v457
  %v472 = vmul.f32 %v454, %v456
  %v473 = vmul.f32 %v455, %v457
  %v474 = vpack.c.bf16 %v459, %v458
  %v475 = vpack.c.bf16 %v461, %v460
  %v476 = vpack.c.bf16 %v463, %v462
  %v477 = vpack.c.bf16 %v465, %v464
  %v478 = vpack.c.bf16 %v467, %v466
  %v479 = vpack.c.bf16 %v469, %v468
  %v480 = vpack.c.bf16 %v471, %v470
  %v481 = vpack.c.bf16 %v473, %v472
  %s482 = scalar_lea.vmem %s2, 64
  %v483 = vld [vmem:[%s482] sm:$0xf]
  %v484 = vld [vmem:[%s482 + $0x4] sm:$0xf]
  %v485 = vld [vmem:[%s482 + $0x8] sm:$0xf]
  %v486 = vld [vmem:[%s482 + $0xc] sm:$0xf]
  %v487 = vld [vmem:[%s482 + $0x10] sm:$0xf]
  %v488 = vld [vmem:[%s482 + $0x14] sm:$0xf]
  %v489 = vld [vmem:[%s482 + $0x18] sm:$0xf]
  %v490 = vld [vmem:[%s482 + $0x1c] sm:$0xf]
  %499 = vrot.lane.b32.xlu0 %v474, 120
  %v500 = vpop.permute.xlu0 %499
  %501 = vrot.lane.b32.xlu0 %v475, 120
  %v502 = vpop.permute.xlu0 %501
  %503 = vrot.lane.b32.xlu0 %v476, 120
  %v504 = vpop.permute.xlu0 %503
  %505 = vrot.lane.b32.xlu0 %v477, 120
  %v506 = vpop.permute.xlu0 %505
  %507 = vrot.lane.b32.xlu0 %v478, 120
  %v508 = vpop.permute.xlu0 %507
  %509 = vrot.lane.b32.xlu0 %v479, 120
  %v510 = vpop.permute.xlu0 %509
  %511 = vrot.lane.b32.xlu0 %v480, 120
  %v512 = vpop.permute.xlu0 %511
  %513 = vrot.lane.b32.xlu0 %v481, 120
  %v514 = vpop.permute.xlu0 %513
  %v523 = vunpack.c.l.b16 %v483
  %v524 = vunpack.c.l.b16 %v484
  %v525 = vunpack.c.l.b16 %v485
  %v526 = vunpack.c.l.b16 %v486
  %v527 = vunpack.c.l.b16 %v487
  %v528 = vunpack.c.l.b16 %v488
  %v529 = vunpack.c.l.b16 %v489
  %v530 = vunpack.c.l.b16 %v490
  %v531 = vpack.c.b16 %v524, %v523
  %v532 = vpack.c.b16 %v526, %v525
  %v533 = vpack.c.b16 %v528, %v527
  %v534 = vpack.c.b16 %v530, %v529
  %v540 = vsel %vm173, %v500, 0
  %v543 = vsel %vm173, %v502, 0
  %v546 = vsel %vm173, %v504, 0
  %v549 = vsel %vm173, %v506, 0
  %v552 = vsel %vm173, %v508, 0
  %v555 = vsel %vm173, %v510, 0
  %v558 = vsel %vm173, %v512, 0
  %v561 = vsel %vm173, %v514, 0
  %563 = vmatprep.subr.bf16.mxu0 0
  %564 = vmatpush1.bf16.msra.mxu0 %v531
  %565 = vmatprep.subr.bf16.mxu0 0
  %566 = vmatpush1.bf16.msra.mxu0 %v532
  %567 = vmatprep.subr.bf16.mxu0 0
  %568 = vmatpush1.bf16.msra.mxu0 %v533
  %569 = vmatprep.subr.bf16.mxu0 0
  %570 = vmatpush1.bf16.msra.mxu0 %v534
  %571 = vmatprep.subr.bf16.mxu0 0
  %572 = vmatpush1.bf16.msra.mxu0 0
  %573 = vmatprep.subr.bf16.mxu0 0
  %574 = vmatpush1.bf16.msra.mxu0 0
  %575 = vmatprep.subr.bf16.mxu0 0
  %576 = vmatpush1.bf16.msra.mxu0 0
  %577 = vmatprep.subr.bf16.mxu0 0
  %578 = vmatpush1.bf16.msra.mxu0 0
  %579 = vmatprep.subr.bf16.mxu0 0
  %580 = vmatpush1.bf16.msra.mxu0 0
  %581 = vmatprep.subr.bf16.mxu0 0
  %582 = vmatpush1.bf16.msra.mxu0 0
  %583 = vmatprep.subr.bf16.mxu0 0
  %584 = vmatpush1.bf16.msra.mxu0 0
  %585 = vmatprep.subr.bf16.mxu0 0
  %586 = vmatpush1.bf16.msra.mxu0 0
  %587 = vmatprep.subr.bf16.mxu0 0
  %588 = vmatpush1.bf16.msra.mxu0 0
  %589 = vmatprep.subr.bf16.mxu0 0
  %590 = vmatpush1.bf16.msra.mxu0 0
  %591 = vmatprep.subr.bf16.mxu0 0
  %592 = vmatpush1.bf16.msra.mxu0 0
  %593 = vmatprep.subr.bf16.mxu0 0
  %594 = vmatpush1.bf16.msra.mxu0 0
  %595 = vmatprep.mubr.bf16.mxu0 0
  %596 = vmatmul.mubr.bf16.gmra.mrb[0].mxu0 %v540
  %v597 = vpop.f32.mrb[0].mxu0
  %v598 = vadd.f32 0.0, %v597
  %v599 = vpop.f32.mrb[0].mxu0
  %v600 = vpop.f32.mrb[0].mxu0
  %v601 = vadd.f32 0.0, %v600
  %v602 = vpop.f32.mrb[0].mxu0
  %603 = vmatprep.mubr.bf16.mxu0 0
  %604 = vmatmul.mubr.bf16.gmra.mrb[0].mxu0 %v543
  %v605 = vpop.f32.mrb[0].mxu0
  %v606 = vadd.f32 0.0, %v605
  %v607 = vpop.f32.mrb[0].mxu0
  %v608 = vpop.f32.mrb[0].mxu0
  %v609 = vadd.f32 0.0, %v608
  %v610 = vpop.f32.mrb[0].mxu0
  %611 = vmatprep.mubr.bf16.mxu0 0
  %612 = vmatmul.mubr.bf16.gmra.mrb[0].mxu0 %v546
  %v613 = vpop.f32.mrb[0].mxu0
  %v614 = vadd.f32 0.0, %v613
  %v615 = vpop.f32.mrb[0].mxu0
  %v616 = vpop.f32.mrb[0].mxu0
  %v617 = vadd.f32 0.0, %v616
  %v618 = vpop.f32.mrb[0].mxu0
  %619 = vmatprep.mubr.bf16.mxu0 0
  %620 = vmatmul.mubr.bf16.gmra.mrb[0].mxu0 %v549
  %v621 = vpop.f32.mrb[0].mxu0
  %v622 = vadd.f32 0.0, %v621
  %v623 = vpop.f32.mrb[0].mxu0
  %v624 = vpop.f32.mrb[0].mxu0
  %v625 = vadd.f32 0.0, %v624
  %v626 = vpop.f32.mrb[0].mxu0
  %627 = vmatprep.mubr.bf16.mxu0 0
  %628 = vmatmul.mubr.bf16.gmra.mrb[0].mxu0 %v552
  %v629 = vpop.f32.mrb[0].mxu0
  %v630 = vadd.f32 0.0, %v629
  %v631 = vpop.f32.mrb[0].mxu0
  %v632 = vpop.f32.mrb[0].mxu0
  %v633 = vadd.f32 0.0, %v632
  %v634 = vpop.f32.mrb[0].mxu0
  %635 = vmatprep.mubr.bf16.mxu0 0
  %636 = vmatmul.mubr.bf16.gmra.mrb[0].mxu0 %v555
  %v637 = vpop.f32.mrb[0].mxu0
  %v638 = vadd.f32 0.0, %v637
  %v639 = vpop.f32.mrb[0].mxu0
  %v640 = vpop.f32.mrb[0].mxu0
  %v641 = vadd.f32 0.0, %v640
  %v642 = vpop.f32.mrb[0].mxu0
  %643 = vmatprep.mubr.bf16.mxu0 0
  %644 = vmatmul.mubr.bf16.gmra.mrb[0].mxu0 %v558
  %v645 = vpop.f32.mrb[0].mxu0
  %v646 = vadd.f32 0.0, %v645
  %v647 = vpop.f32.mrb[0].mxu0
  %v648 = vpop.f32.mrb[0].mxu0
  %v649 = vadd.f32 0.0, %v648
  %v650 = vpop.f32.mrb[0].mxu0
  %651 = vmatprep.mubr.bf16.mxu0 0
  %652 = vmatmul.mubr.bf16.gmra.mrb[0].mxu0 %v561
  %v653 = vpop.f32.mrb[0].mxu0
  %v654 = vadd.f32 0.0, %v653
  %v655 = vpop.f32.mrb[0].mxu0
  %v656 = vpop.f32.mrb[0].mxu0
  %v657 = vadd.f32 0.0, %v656
  %v658 = vpop.f32.mrb[0].mxu0
  %659 = vdwg.mxu0
  %v660 = vadd.f32 %v378, %v598
  %v661 = vadd.f32 %v381, %v601
  %v662 = vadd.f32 %v386, %v606
  %v663 = vadd.f32 %v389, %v609
  %v664 = vadd.f32 %v394, %v614
  %v665 = vadd.f32 %v397, %v617
  %v666 = vadd.f32 %v402, %v622
  %v667 = vadd.f32 %v405, %v625
  %v668 = vadd.f32 %v410, %v630
  %v669 = vadd.f32 %v413, %v633
  %v670 = vadd.f32 %v418, %v638
  %v671 = vadd.f32 %v421, %v641
  %v672 = vadd.f32 %v426, %v646
  %v673 = vadd.f32 %v429, %v649
  %v674 = vadd.f32 %v434, %v654
  %v675 = vadd.f32 %v437, %v657
  %v676 = vld [vmem:[%s0 + $0x1] sm:$0xff]
  %v677 = vld [vmem:[%s0 + $0x9] sm:$0xff]
  %v678 = vld [vmem:[%s0 + $0x19] sm:$0xff]
  %v679 = vld [vmem:[%s0 + $0x21] sm:$0xff]
  %v680 = vld [vmem:[%s0 + $0x31] sm:$0xff]
  %v681 = vld [vmem:[%s0 + $0x39] sm:$0xff]
  %v682 = vld [vmem:[%s0 + $0x49] sm:$0xff]
  %v683 = vld [vmem:[%s0 + $0x51] sm:$0xff]
  %v684 = vld [vmem:[%s0 + $0x61] sm:$0xff]
  %v685 = vld [vmem:[%s0 + $0x69] sm:$0xff]
  %v686 = vld [vmem:[%s0 + $0x79] sm:$0xff]
  %v687 = vld [vmem:[%s0 + $0x81] sm:$0xff]
  %v688 = vld [vmem:[%s0 + $0x91] sm:$0xff]
  %v689 = vld [vmem:[%s0 + $0x99] sm:$0xff]
  %v690 = vld [vmem:[%s0 + $0xa9] sm:$0xff]
  %v691 = vld [vmem:[%s0 + $0xb1] sm:$0xff]
  %v692 = vld [vmem:[%s1 + $0x1] sm:$0xff]
  %v693 = vld [vmem:[%s1 + $0x9] sm:$0xff]
  %v694 = vmul.f32 %v676, %v692
  %v695 = vmul.f32 %v677, %v693
  %v696 = vmul.f32 %v678, %v692
  %v697 = vmul.f32 %v679, %v693
  %v698 = vmul.f32 %v680, %v692
  %v699 = vmul.f32 %v681, %v693
  %v700 = vmul.f32 %v682, %v692
  %v701 = vmul.f32 %v683, %v693
  %v702 = vmul.f32 %v684, %v692
  %v703 = vmul.f32 %v685, %v693
  %v704 = vmul.f32 %v686, %v692
  %v705 = vmul.f32 %v687, %v693
  %v706 = vmul.f32 %v688, %v692
  %v707 = vmul.f32 %v689, %v693
  %v708 = vmul.f32 %v690, %v692
  %v709 = vmul.f32 %v691, %v693
  %v710 = vpack.c.bf16 %v695, %v694
  %v711 = vpack.c.bf16 %v697, %v696
  %v712 = vpack.c.bf16 %v699, %v698
  %v713 = vpack.c.bf16 %v701, %v700
  %v714 = vpack.c.bf16 %v703, %v702
  %v715 = vpack.c.bf16 %v705, %v704
  %v716 = vpack.c.bf16 %v707, %v706
  %v717 = vpack.c.bf16 %v709, %v708
  %s718 = scalar_lea.vmem %s2, 96
  %v719 = vld [vmem:[%s718] sm:$0xf]
  %v720 = vld [vmem:[%s718 + $0x4] sm:$0xf]
  %v721 = vld [vmem:[%s718 + $0x8] sm:$0xf]
  %v722 = vld [vmem:[%s718 + $0xc] sm:$0xf]
  %v723 = vld [vmem:[%s718 + $0x10] sm:$0xf]
  %v724 = vld [vmem:[%s718 + $0x14] sm:$0xf]
  %v725 = vld [vmem:[%s718 + $0x18] sm:$0xf]
  %v726 = vld [vmem:[%s718 + $0x1c] sm:$0xf]
  %v735 = vunpack.c.l.b16 %v719
  %v736 = vunpack.c.l.b16 %v720
  %v737 = vunpack.c.l.b16 %v721
  %v738 = vunpack.c.l.b16 %v722
  %v739 = vunpack.c.l.b16 %v723
  %v740 = vunpack.c.l.b16 %v724
  %v741 = vunpack.c.l.b16 %v725
  %v742 = vunpack.c.l.b16 %v726
  %v743 = vpack.c.b16 %v736, %v735
  %v744 = vpack.c.b16 %v738, %v737
  %v745 = vpack.c.b16 %v740, %v739
  %v746 = vpack.c.b16 %v742, %v741
  %v752 = vsel %vm173, %v710, 0
  %v755 = vsel %vm173, %v711, 0
  %v758 = vsel %vm173, %v712, 0
  %v761 = vsel %vm173, %v713, 0
  %v764 = vsel %vm173, %v714, 0
  %v767 = vsel %vm173, %v715, 0
  %v770 = vsel %vm173, %v716, 0
  %v773 = vsel %vm173, %v717, 0
  %775 = vmatprep.subr.bf16.mxu0 0
  %776 = vmatpush1.bf16.msra.mxu0 %v743
  %777 = vmatprep.subr.bf16.mxu0 0
  %778 = vmatpush1.bf16.msra.mxu0 %v744
  %779 = vmatprep.subr.bf16.mxu0 0
  %780 = vmatpush1.bf16.msra.mxu0 %v745
  %781 = vmatprep.subr.bf16.mxu0 0
  %782 = vmatpush1.bf16.msra.mxu0 %v746
  %783 = vmatprep.subr.bf16.mxu0 0
  %784 = vmatpush1.bf16.msra.mxu0 0
  %785 = vmatprep.subr.bf16.mxu0 0
  %786 = vmatpush1.bf16.msra.mxu0 0
  %787 = vmatprep.subr.bf16.mxu0 0
  %788 = vmatpush1.bf16.msra.mxu0 0
  %789 = vmatprep.subr.bf16.mxu0 0
  %790 = vmatpush1.bf16.msra.mxu0 0
  %791 = vmatprep.subr.bf16.mxu0 0
  %792 = vmatpush1.bf16.msra.mxu0 0
  %793 = vmatprep.subr.bf16.mxu0 0
  %794 = vmatpush1.bf16.msra.mxu0 0
  %795 = vmatprep.subr.bf16.mxu0 0
  %796 = vmatpush1.bf16.msra.mxu0 0
  %797 = vmatprep.subr.bf16.mxu0 0
  %798 = vmatpush1.bf16.msra.mxu0 0
  %799 = vmatprep.subr.bf16.mxu0 0
  %800 = vmatpush1.bf16.msra.mxu0 0
  %801 = vmatprep.subr.bf16.mxu0 0
  %802 = vmatpush1.bf16.msra.mxu0 0
  %803 = vmatprep.subr.bf16.mxu0 0
  %804 = vmatpush1.bf16.msra.mxu0 0
  %805 = vmatprep.subr.bf16.mxu0 0
  %806 = vmatpush1.bf16.msra.mxu0 0
  %807 = vmatprep.mubr.bf16.mxu0 0
  %808 = vmatmul.mubr.bf16.gmra.mrb[0].mxu0 %v752
  %v809 = vpop.f32.mrb[0].mxu0
  %v810 = vadd.f32 0.0, %v809
  %v811 = vpop.f32.mrb[0].mxu0
  %v812 = vpop.f32.mrb[0].mxu0
  %v813 = vadd.f32 0.0, %v812
  %v814 = vpop.f32.mrb[0].mxu0
  %815 = vmatprep.mubr.bf16.mxu0 0
  %816 = vmatmul.mubr.bf16.gmra.mrb[0].mxu0 %v755
  %v817 = vpop.f32.mrb[0].mxu0
  %v818 = vadd.f32 0.0, %v817
  %v819 = vpop.f32.mrb[0].mxu0
  %v820 = vpop.f32.mrb[0].mxu0
  %v821 = vadd.f32 0.0, %v820
  %v822 = vpop.f32.mrb[0].mxu0
  %823 = vmatprep.mubr.bf16.mxu0 0
  %824 = vmatmul.mubr.bf16.gmra.mrb[0].mxu0 %v758
  %v825 = vpop.f32.mrb[0].mxu0
  %v826 = vadd.f32 0.0, %v825
  %v827 = vpop.f32.mrb[0].mxu0
  %v828 = vpop.f32.mrb[0].mxu0
  %v829 = vadd.f32 0.0, %v828
  %v830 = vpop.f32.mrb[0].mxu0
  %831 = vmatprep.mubr.bf16.mxu0 0
  %832 = vmatmul.mubr.bf16.gmra.mrb[0].mxu0 %v761
  %v833 = vpop.f32.mrb[0].mxu0
  %v834 = vadd.f32 0.0, %v833
  %v835 = vpop.f32.mrb[0].mxu0
  %v836 = vpop.f32.mrb[0].mxu0
  %v837 = vadd.f32 0.0, %v836
  %v838 = vpop.f32.mrb[0].mxu0
  %839 = vmatprep.mubr.bf16.mxu0 0
  %840 = vmatmul.mubr.bf16.gmra.mrb[0].mxu0 %v764
  %v841 = vpop.f32.mrb[0].mxu0
  %v842 = vadd.f32 0.0, %v841
  %v843 = vpop.f32.mrb[0].mxu0
  %v844 = vpop.f32.mrb[0].mxu0
  %v845 = vadd.f32 0.0, %v844
  %v846 = vpop.f32.mrb[0].mxu0
  %847 = vmatprep.mubr.bf16.mxu0 0
  %848 = vmatmul.mubr.bf16.gmra.mrb[0].mxu0 %v767
  %v849 = vpop.f32.mrb[0].mxu0
  %v850 = vadd.f32 0.0, %v849
  %v851 = vpop.f32.mrb[0].mxu0
  %v852 = vpop.f32.mrb[0].mxu0
  %v853 = vadd.f32 0.0, %v852
  %v854 = vpop.f32.mrb[0].mxu0
  %855 = vmatprep.mubr.bf16.mxu0 0
  %856 = vmatmul.mubr.bf16.gmra.mrb[0].mxu0 %v770
  %v857 = vpop.f32.mrb[0].mxu0
  %v858 = vadd.f32 0.0, %v857
  %v859 = vpop.f32.mrb[0].mxu0
  %v860 = vpop.f32.mrb[0].mxu0
  %v861 = vadd.f32 0.0, %v860
  %v862 = vpop.f32.mrb[0].mxu0
  %863 = vmatprep.mubr.bf16.mxu0 0
  %864 = vmatmul.mubr.bf16.gmra.mrb[0].mxu0 %v773
  %v865 = vpop.f32.mrb[0].mxu0
  %v866 = vadd.f32 0.0, %v865
  %v867 = vpop.f32.mrb[0].mxu0
  %v868 = vpop.f32.mrb[0].mxu0
  %v869 = vadd.f32 0.0, %v868
  %v870 = vpop.f32.mrb[0].mxu0
  %871 = vdwg.mxu0
  %v872 = vadd.f32 %v660, %v810
  %v873 = vadd.f32 %v661, %v813
  %v874 = vadd.f32 %v662, %v818
  %v875 = vadd.f32 %v663, %v821
  %v876 = vadd.f32 %v664, %v826
  %v877 = vadd.f32 %v665, %v829
  %v878 = vadd.f32 %v666, %v834
  %v879 = vadd.f32 %v667, %v837
  %v880 = vadd.f32 %v668, %v842
  %v881 = vadd.f32 %v669, %v845
  %v882 = vadd.f32 %v670, %v850
  %v883 = vadd.f32 %v671, %v853
  %v884 = vadd.f32 %v672, %v858
  %v885 = vadd.f32 %v673, %v861
  %v886 = vadd.f32 %v674, %v866
  %v887 = vadd.f32 %v675, %v869
  %v888 = vld [vmem:[%s0 + $0x1] sm:$0xff]
  %v889 = vld [vmem:[%s0 + $0x9] sm:$0xff]
  %v890 = vld [vmem:[%s0 + $0x19] sm:$0xff]
  %v891 = vld [vmem:[%s0 + $0x21] sm:$0xff]
  %v892 = vld [vmem:[%s0 + $0x31] sm:$0xff]
  %v893 = vld [vmem:[%s0 + $0x39] sm:$0xff]
  %v894 = vld [vmem:[%s0 + $0x49] sm:$0xff]
  %v895 = vld [vmem:[%s0 + $0x51] sm:$0xff]
  %v896 = vld [vmem:[%s0 + $0x61] sm:$0xff]
  %v897 = vld [vmem:[%s0 + $0x69] sm:$0xff]
  %v898 = vld [vmem:[%s0 + $0x79] sm:$0xff]
  %v899 = vld [vmem:[%s0 + $0x81] sm:$0xff]
  %v900 = vld [vmem:[%s0 + $0x91] sm:$0xff]
  %v901 = vld [vmem:[%s0 + $0x99] sm:$0xff]
  %v902 = vld [vmem:[%s0 + $0xa9] sm:$0xff]
  %v903 = vld [vmem:[%s0 + $0xb1] sm:$0xff]
  %v904 = vld [vmem:[%s1 + $0x1] sm:$0xff]
  %v905 = vld [vmem:[%s1 + $0x9] sm:$0xff]
  %v906 = vmul.f32 %v888, %v904
  %v907 = vmul.f32 %v889, %v905
  %v908 = vmul.f32 %v890, %v904
  %v909 = vmul.f32 %v891, %v905
  %v910 = vmul.f32 %v892, %v904
  %v911 = vmul.f32 %v893, %v905
  %v912 = vmul.f32 %v894, %v904
  %v913 = vmul.f32 %v895, %v905
  %v914 = vmul.f32 %v896, %v904
  %v915 = vmul.f32 %v897, %v905
  %v916 = vmul.f32 %v898, %v904
  %v917 = vmul.f32 %v899, %v905
  %v918 = vmul.f32 %v900, %v904
  %v919 = vmul.f32 %v901, %v905
  %v920 = vmul.f32 %v902, %v904
  %v921 = vmul.f32 %v903, %v905
  %v922 = vpack.c.bf16 %v907, %v906
  %v923 = vpack.c.bf16 %v909, %v908
  %v924 = vpack.c.bf16 %v911, %v910
  %v925 = vpack.c.bf16 %v913, %v912
  %v926 = vpack.c.bf16 %v915, %v914
  %v927 = vpack.c.bf16 %v917, %v916
  %v928 = vpack.c.bf16 %v919, %v918
  %v929 = vpack.c.bf16 %v921, %v920
  %s930 = scalar_lea.vmem %s2, 128
  %v931 = vld [vmem:[%s930] sm:$0xf]
  %v932 = vld [vmem:[%s930 + $0x4] sm:$0xf]
  %v933 = vld [vmem:[%s930 + $0x8] sm:$0xf]
  %v934 = vld [vmem:[%s930 + $0xc] sm:$0xf]
  %v935 = vld [vmem:[%s930 + $0x10] sm:$0xf]
  %v936 = vld [vmem:[%s930 + $0x14] sm:$0xf]
  %v937 = vld [vmem:[%s930 + $0x18] sm:$0xf]
  %v938 = vld [vmem:[%s930 + $0x1c] sm:$0xf]
  %947 = vrot.lane.b32.xlu0 %v922, 124
  %v948 = vpop.permute.xlu0 %947
  %949 = vrot.lane.b32.xlu0 %v923, 124
  %v950 = vpop.permute.xlu0 %949
  %951 = vrot.lane.b32.xlu0 %v924, 124
  %v952 = vpop.permute.xlu0 %951
  %953 = vrot.lane.b32.xlu0 %v925, 124
  %v954 = vpop.permute.xlu0 %953
  %955 = vrot.lane.b32.xlu0 %v926, 124
  %v956 = vpop.permute.xlu0 %955
  %957 = vrot.lane.b32.xlu0 %v927, 124
  %v958 = vpop.permute.xlu0 %957
  %959 = vrot.lane.b32.xlu0 %v928, 124
  %v960 = vpop.permute.xlu0 %959
  %961 = vrot.lane.b32.xlu0 %v929, 124
  %v962 = vpop.permute.xlu0 %961
  %v971 = vunpack.c.l.b16 %v931
  %v972 = vunpack.c.l.b16 %v932
  %v973 = vunpack.c.l.b16 %v933
  %v974 = vunpack.c.l.b16 %v934
  %v975 = vunpack.c.l.b16 %v935
  %v976 = vunpack.c.l.b16 %v936
  %v977 = vunpack.c.l.b16 %v937
  %v978 = vunpack.c.l.b16 %v938
  %v979 = vpack.c.b16 %v972, %v971
  %v980 = vpack.c.b16 %v974, %v973
  %v981 = vpack.c.b16 %v976, %v975
  %v982 = vpack.c.b16 %v978, %v977
  %v988 = vsel %vm173, %v948, 0
  %v991 = vsel %vm173, %v950, 0
  %v994 = vsel %vm173, %v952, 0
  %v997 = vsel %vm173, %v954, 0
  %v1000 = vsel %vm173, %v956, 0
  %v1003 = vsel %vm173, %v958, 0
  %v1006 = vsel %vm173, %v960, 0
  %v1009 = vsel %vm173, %v962, 0
  %1011 = vmatprep.subr.bf16.mxu0 0
  %1012 = vmatpush1.bf16.msra.mxu0 %v979
  %1013 = vmatprep.subr.bf16.mxu0 0
  %1014 = vmatpush1.bf16.msra.mxu0 %v980
  %1015 = vmatprep.subr.bf16.mxu0 0
  %1016 = vmatpush1.bf16.msra.mxu0 %v981
  %1017 = vmatprep.subr.bf16.mxu0 0
  %1018 = vmatpush1.bf16.msra.mxu0 %v982
  %1019 = vmatprep.subr.bf16.mxu0 0
  %1020 = vmatpush1.bf16.msra.mxu0 0
  %1021 = vmatprep.subr.bf16.mxu0 0
  %1022 = vmatpush1.bf16.msra.mxu0 0
  %1023 = vmatprep.subr.bf16.mxu0 0
  %1024 = vmatpush1.bf16.msra.mxu0 0
  %1025 = vmatprep.subr.bf16.mxu0 0
  %1026 = vmatpush1.bf16.msra.mxu0 0
  %1027 = vmatprep.subr.bf16.mxu0 0
  %1028 = vmatpush1.bf16.msra.mxu0 0
  %1029 = vmatprep.subr.bf16.mxu0 0
  %1030 = vmatpush1.bf16.msra.mxu0 0
  %1031 = vmatprep.subr.bf16.mxu0 0
  %1032 = vmatpush1.bf16.msra.mxu0 0
  %1033 = vmatprep.subr.bf16.mxu0 0
  %1034 = vmatpush1.bf16.msra.mxu0 0
  %1035 = vmatprep.subr.bf16.mxu0 0
  %1036 = vmatpush1.bf16.msra.mxu0 0
  %1037 = vmatprep.subr.bf16.mxu0 0
  %1038 = vmatpush1.bf16.msra.mxu0 0
  %1039 = vmatprep.subr.bf16.mxu0 0
  %1040 = vmatpush1.bf16.msra.mxu0 0
  %1041 = vmatprep.subr.bf16.mxu0 0
  %1042 = vmatpush1.bf16.msra.mxu0 0
  %1043 = vmatprep.mubr.bf16.mxu0 0
  %1044 = vmatmul.mubr.bf16.gmra.mrb[0].mxu0 %v988
  %v1045 = vpop.f32.mrb[0].mxu0
  %v1046 = vadd.f32 0.0, %v1045
  %v1047 = vpop.f32.mrb[0].mxu0
  %v1048 = vpop.f32.mrb[0].mxu0
  %v1049 = vadd.f32 0.0, %v1048
  %v1050 = vpop.f32.mrb[0].mxu0
  %1051 = vmatprep.mubr.bf16.mxu0 0
  %1052 = vmatmul.mubr.bf16.gmra.mrb[0].mxu0 %v991
  %v1053 = vpop.f32.mrb[0].mxu0
  %v1054 = vadd.f32 0.0, %v1053
  %v1055 = vpop.f32.mrb[0].mxu0
  %v1056 = vpop.f32.mrb[0].mxu0
  %v1057 = vadd.f32 0.0, %v1056
  %v1058 = vpop.f32.mrb[0].mxu0
  %1059 = vmatprep.mubr.bf16.mxu0 0
  %1060 = vmatmul.mubr.bf16.gmra.mrb[0].mxu0 %v994
  %v1061 = vpop.f32.mrb[0].mxu0
  %v1062 = vadd.f32 0.0, %v1061
  %v1063 = vpop.f32.mrb[0].mxu0
  %v1064 = vpop.f32.mrb[0].mxu0
  %v1065 = vadd.f32 0.0, %v1064
  %v1066 = vpop.f32.mrb[0].mxu0
  %1067 = vmatprep.mubr.bf16.mxu0 0
  %1068 = vmatmul.mubr.bf16.gmra.mrb[0].mxu0 %v997
  %v1069 = vpop.f32.mrb[0].mxu0
  %v1070 = vadd.f32 0.0, %v1069
  %v1071 = vpop.f32.mrb[0].mxu0
  %v1072 = vpop.f32.mrb[0].mxu0
  %v1073 = vadd.f32 0.0, %v1072
  %v1074 = vpop.f32.mrb[0].mxu0
  %1075 = vmatprep.mubr.bf16.mxu0 0
  %1076 = vmatmul.mubr.bf16.gmra.mrb[0].mxu0 %v1000
  %v1077 = vpop.f32.mrb[0].mxu0
  %v1078 = vadd.f32 0.0, %v1077
  %v1079 = vpop.f32.mrb[0].mxu0
  %v1080 = vpop.f32.mrb[0].mxu0
  %v1081 = vadd.f32 0.0, %v1080
  %v1082 = vpop.f32.mrb[0].mxu0
  %1083 = vmatprep.mubr.bf16.mxu0 0
  %1084 = vmatmul.mubr.bf16.gmra.mrb[0].mxu0 %v1003
  %v1085 = vpop.f32.mrb[0].mxu0
  %v1086 = vadd.f32 0.0, %v1085
  %v1087 = vpop.f32.mrb[0].mxu0
  %v1088 = vpop.f32.mrb[0].mxu0
  %v1089 = vadd.f32 0.0, %v1088
  %v1090 = vpop.f32.mrb[0].mxu0
  %1091 = vmatprep.mubr.bf16.mxu0 0
  %1092 = vmatmul.mubr.bf16.gmra.mrb[0].mxu0 %v1006
  %v1093 = vpop.f32.mrb[0].mxu0
  %v1094 = vadd.f32 0.0, %v1093
  %v1095 = vpop.f32.mrb[0].mxu0
  %v1096 = vpop.f32.mrb[0].mxu0
  %v1097 = vadd.f32 0.0, %v1096
  %v1098 = vpop.f32.mrb[0].mxu0
  %1099 = vmatprep.mubr.bf16.mxu0 0
  %1100 = vmatmul.mubr.bf16.gmra.mrb[0].mxu0 %v1009
  %v1101 = vpop.f32.mrb[0].mxu0
  %v1102 = vadd.f32 0.0, %v1101
  %v1103 = vpop.f32.mrb[0].mxu0
  %v1104 = vpop.f32.mrb[0].mxu0
  %v1105 = vadd.f32 0.0, %v1104
  %v1106 = vpop.f32.mrb[0].mxu0
  %1107 = vdwg.mxu0
  %v1108 = vadd.f32 %v872, %v1046
  %v1109 = vadd.f32 %v873, %v1049
  %v1110 = vadd.f32 %v874, %v1054
  %v1111 = vadd.f32 %v875, %v1057
  %v1112 = vadd.f32 %v876, %v1062
  %v1113 = vadd.f32 %v877, %v1065
  %v1114 = vadd.f32 %v878, %v1070
  %v1115 = vadd.f32 %v879, %v1073
  %v1116 = vadd.f32 %v880, %v1078
  %v1117 = vadd.f32 %v881, %v1081
  %v1118 = vadd.f32 %v882, %v1086
  %v1119 = vadd.f32 %v883, %v1089
  %v1120 = vadd.f32 %v884, %v1094
  %v1121 = vadd.f32 %v885, %v1097
  %v1122 = vadd.f32 %v886, %v1102
  %v1123 = vadd.f32 %v887, %v1105
  %v1124 = vld [vmem:[%s0 + $0x1] sm:$0xff]
  %v1125 = vld [vmem:[%s0 + $0x9] sm:$0xff]
  %v1126 = vld [vmem:[%s0 + $0x19] sm:$0xff]
  %v1127 = vld [vmem:[%s0 + $0x21] sm:$0xff]
  %v1128 = vld [vmem:[%s0 + $0x31] sm:$0xff]
  %v1129 = vld [vmem:[%s0 + $0x39] sm:$0xff]
  %v1130 = vld [vmem:[%s0 + $0x49] sm:$0xff]
  %v1131 = vld [vmem:[%s0 + $0x51] sm:$0xff]
  %v1132 = vld [vmem:[%s0 + $0x61] sm:$0xff]
  %v1133 = vld [vmem:[%s0 + $0x69] sm:$0xff]
  %v1134 = vld [vmem:[%s0 + $0x79] sm:$0xff]
  %v1135 = vld [vmem:[%s0 + $0x81] sm:$0xff]
  %v1136 = vld [vmem:[%s0 + $0x91] sm:$0xff]
  %v1137 = vld [vmem:[%s0 + $0x99] sm:$0xff]
  %v1138 = vld [vmem:[%s0 + $0xa9] sm:$0xff]
  %v1139 = vld [vmem:[%s0 + $0xb1] sm:$0xff]
  %v1140 = vld [vmem:[%s1 + $0x1] sm:$0xff]
  %v1141 = vld [vmem:[%s1 + $0x9] sm:$0xff]
  %v1142 = vmul.f32 %v1124, %v1140
  %v1143 = vmul.f32 %v1125, %v1141
  %v1144 = vmul.f32 %v1126, %v1140
  %v1145 = vmul.f32 %v1127, %v1141
  %v1146 = vmul.f32 %v1128, %v1140
  %v1147 = vmul.f32 %v1129, %v1141
  %v1148 = vmul.f32 %v1130, %v1140
  %v1149 = vmul.f32 %v1131, %v1141
  %v1150 = vmul.f32 %v1132, %v1140
  %v1151 = vmul.f32 %v1133, %v1141
  %v1152 = vmul.f32 %v1134, %v1140
  %v1153 = vmul.f32 %v1135, %v1141
  %v1154 = vmul.f32 %v1136, %v1140
  %v1155 = vmul.f32 %v1137, %v1141
  %v1156 = vmul.f32 %v1138, %v1140
  %v1157 = vmul.f32 %v1139, %v1141
  %v1158 = vpack.c.bf16 %v1143, %v1142
  %v1159 = vpack.c.bf16 %v1145, %v1144
  %v1160 = vpack.c.bf16 %v1147, %v1146
  %v1161 = vpack.c.bf16 %v1149, %v1148
  %v1162 = vpack.c.bf16 %v1151, %v1150
  %v1163 = vpack.c.bf16 %v1153, %v1152
  %v1164 = vpack.c.bf16 %v1155, %v1154
  %v1165 = vpack.c.bf16 %v1157, %v1156
  %s1166 = scalar_lea.vmem %s2, 160
  %v1167 = vld [vmem:[%s1166] sm:$0xf]
  %v1168 = vld [vmem:[%s1166 + $0x4] sm:$0xf]
  %v1169 = vld [vmem:[%s1166 + $0x8] sm:$0xf]
  %v1170 = vld [vmem:[%s1166 + $0xc] sm:$0xf]
  %v1171 = vld [vmem:[%s1166 + $0x10] sm:$0xf]
  %v1172 = vld [vmem:[%s1166 + $0x14] sm:$0xf]
  %v1173 = vld [vmem:[%s1166 + $0x18] sm:$0xf]
  %v1174 = vld [vmem:[%s1166 + $0x1c] sm:$0xf]
  %1183 = vrot.lane.b32.xlu0 %v1158, 120
  %v1184 = vpop.permute.xlu0 %1183
  %1185 = vrot.lane.b32.xlu0 %v1159, 120
  %v1186 = vpop.permute.xlu0 %1185
  %1187 = vrot.lane.b32.xlu0 %v1160, 120
  %v1188 = vpop.permute.xlu0 %1187
  %1189 = vrot.lane.b32.xlu0 %v1161, 120
  %v1190 = vpop.permute.xlu0 %1189
  %1191 = vrot.lane.b32.xlu0 %v1162, 120
  %v1192 = vpop.permute.xlu0 %1191
  %1193 = vrot.lane.b32.xlu0 %v1163, 120
  %v1194 = vpop.permute.xlu0 %1193
  %1195 = vrot.lane.b32.xlu0 %v1164, 120
  %v1196 = vpop.permute.xlu0 %1195
  %1197 = vrot.lane.b32.xlu0 %v1165, 120
  %v1198 = vpop.permute.xlu0 %1197
  %v1207 = vunpack.c.l.b16 %v1167
  %v1208 = vunpack.c.l.b16 %v1168
  %v1209 = vunpack.c.l.b16 %v1169
  %v1210 = vunpack.c.l.b16 %v1170
  %v1211 = vunpack.c.l.b16 %v1171
  %v1212 = vunpack.c.l.b16 %v1172
  %v1213 = vunpack.c.l.b16 %v1173
  %v1214 = vunpack.c.l.b16 %v1174
  %v1215 = vpack.c.b16 %v1208, %v1207
  %v1216 = vpack.c.b16 %v1210, %v1209
  %v1217 = vpack.c.b16 %v1212, %v1211
  %v1218 = vpack.c.b16 %v1214, %v1213
  %v1224 = vsel %vm173, %v1184, 0
  %v1227 = vsel %vm173, %v1186, 0
  %v1230 = vsel %vm173, %v1188, 0
  %v1233 = vsel %vm173, %v1190, 0
  %v1236 = vsel %vm173, %v1192, 0
  %v1239 = vsel %vm173, %v1194, 0
  %v1242 = vsel %vm173, %v1196, 0
  %v1245 = vsel %vm173, %v1198, 0
  %1247 = vmatprep.subr.bf16.mxu0 0
  %1248 = vmatpush1.bf16.msra.mxu0 %v1215
  %1249 = vmatprep.subr.bf16.mxu0 0
  %1250 = vmatpush1.bf16.msra.mxu0 %v1216
  %1251 = vmatprep.subr.bf16.mxu0 0
  %1252 = vmatpush1.bf16.msra.mxu0 %v1217
  %1253 = vmatprep.subr.bf16.mxu0 0
  %1254 = vmatpush1.bf16.msra.mxu0 %v1218
  %1255 = vmatprep.subr.bf16.mxu0 0
  %1256 = vmatpush1.bf16.msra.mxu0 0
  %1257 = vmatprep.subr.bf16.mxu0 0
  %1258 = vmatpush1.bf16.msra.mxu0 0
  %1259 = vmatprep.subr.bf16.mxu0 0
  %1260 = vmatpush1.bf16.msra.mxu0 0
  %1261 = vmatprep.subr.bf16.mxu0 0
  %1262 = vmatpush1.bf16.msra.mxu0 0
  %1263 = vmatprep.subr.bf16.mxu0 0
  %1264 = vmatpush1.bf16.msra.mxu0 0
  %1265 = vmatprep.subr.bf16.mxu0 0
  %1266 = vmatpush1.bf16.msra.mxu0 0
  %1267 = vmatprep.subr.bf16.mxu0 0
  %1268 = vmatpush1.bf16.msra.mxu0 0
  %1269 = vmatprep.subr.bf16.mxu0 0
  %1270 = vmatpush1.bf16.msra.mxu0 0
  %1271 = vmatprep.subr.bf16.mxu0 0
  %1272 = vmatpush1.bf16.msra.mxu0 0
  %1273 = vmatprep.subr.bf16.mxu0 0
  %1274 = vmatpush1.bf16.msra.mxu0 0
  %1275 = vmatprep.subr.bf16.mxu0 0
  %1276 = vmatpush1.bf16.msra.mxu0 0
  %1277 = vmatprep.subr.bf16.mxu0 0
  %1278 = vmatpush1.bf16.msra.mxu0 0
  %1279 = vmatprep.mubr.bf16.mxu0 0
  %1280 = vmatmul.mubr.bf16.gmra.mrb[0].mxu0 %v1224
  %v1281 = vpop.f32.mrb[0].mxu0
  %v1282 = vadd.f32 0.0, %v1281
  %v1283 = vpop.f32.mrb[0].mxu0
  %v1284 = vpop.f32.mrb[0].mxu0
  %v1285 = vadd.f32 0.0, %v1284
  %v1286 = vpop.f32.mrb[0].mxu0
  %1287 = vmatprep.mubr.bf16.mxu0 0
  %1288 = vmatmul.mubr.bf16.gmra.mrb[0].mxu0 %v1227
  %v1289 = vpop.f32.mrb[0].mxu0
  %v1290 = vadd.f32 0.0, %v1289
  %v1291 = vpop.f32.mrb[0].mxu0
  %v1292 = vpop.f32.mrb[0].mxu0
  %v1293 = vadd.f32 0.0, %v1292
  %v1294 = vpop.f32.mrb[0].mxu0
  %1295 = vmatprep.mubr.bf16.mxu0 0
  %1296 = vmatmul.mubr.bf16.gmra.mrb[0].mxu0 %v1230
  %v1297 = vpop.f32.mrb[0].mxu0
  %v1298 = vadd.f32 0.0, %v1297
  %v1299 = vpop.f32.mrb[0].mxu0
  %v1300 = vpop.f32.mrb[0].mxu0
  %v1301 = vadd.f32 0.0, %v1300
  %v1302 = vpop.f32.mrb[0].mxu0
  %1303 = vmatprep.mubr.bf16.mxu0 0
  %1304 = vmatmul.mubr.bf16.gmra.mrb[0].mxu0 %v1233
  %v1305 = vpop.f32.mrb[0].mxu0
  %v1306 = vadd.f32 0.0, %v1305
  %v1307 = vpop.f32.mrb[0].mxu0
  %v1308 = vpop.f32.mrb[0].mxu0
  %v1309 = vadd.f32 0.0, %v1308
  %v1310 = vpop.f32.mrb[0].mxu0
  %1311 = vmatprep.mubr.bf16.mxu0 0
  %1312 = vmatmul.mubr.bf16.gmra.mrb[0].mxu0 %v1236
  %v1313 = vpop.f32.mrb[0].mxu0
  %v1314 = vadd.f32 0.0, %v1313
  %v1315 = vpop.f32.mrb[0].mxu0
  %v1316 = vpop.f32.mrb[0].mxu0
  %v1317 = vadd.f32 0.0, %v1316
  %v1318 = vpop.f32.mrb[0].mxu0
  %1319 = vmatprep.mubr.bf16.mxu0 0
  %1320 = vmatmul.mubr.bf16.gmra.mrb[0].mxu0 %v1239
  %v1321 = vpop.f32.mrb[0].mxu0
  %v1322 = vadd.f32 0.0, %v1321
  %v1323 = vpop.f32.mrb[0].mxu0
  %v1324 = vpop.f32.mrb[0].mxu0
  %v1325 = vadd.f32 0.0, %v1324
  %v1326 = vpop.f32.mrb[0].mxu0
  %1327 = vmatprep.mubr.bf16.mxu0 0
  %1328 = vmatmul.mubr.bf16.gmra.mrb[0].mxu0 %v1242
  %v1329 = vpop.f32.mrb[0].mxu0
  %v1330 = vadd.f32 0.0, %v1329
  %v1331 = vpop.f32.mrb[0].mxu0
  %v1332 = vpop.f32.mrb[0].mxu0
  %v1333 = vadd.f32 0.0, %v1332
  %v1334 = vpop.f32.mrb[0].mxu0
  %1335 = vmatprep.mubr.bf16.mxu0 0
  %1336 = vmatmul.mubr.bf16.gmra.mrb[0].mxu0 %v1245
  %v1337 = vpop.f32.mrb[0].mxu0
  %v1338 = vadd.f32 0.0, %v1337
  %v1339 = vpop.f32.mrb[0].mxu0
  %v1340 = vpop.f32.mrb[0].mxu0
  %v1341 = vadd.f32 0.0, %v1340
  %v1342 = vpop.f32.mrb[0].mxu0
  %1343 = vdwg.mxu0
  %v1344 = vadd.f32 %v1108, %v1282
  %v1345 = vadd.f32 %v1109, %v1285
  %v1346 = vadd.f32 %v1110, %v1290
  %v1347 = vadd.f32 %v1111, %v1293
  %v1348 = vadd.f32 %v1112, %v1298
  %v1349 = vadd.f32 %v1113, %v1301
  %v1350 = vadd.f32 %v1114, %v1306
  %v1351 = vadd.f32 %v1115, %v1309
  %v1352 = vadd.f32 %v1116, %v1314
  %v1353 = vadd.f32 %v1117, %v1317
  %v1354 = vadd.f32 %v1118, %v1322
  %v1355 = vadd.f32 %v1119, %v1325
  %v1356 = vadd.f32 %v1120, %v1330
  %v1357 = vadd.f32 %v1121, %v1333
  %v1358 = vadd.f32 %v1122, %v1338
  %v1359 = vadd.f32 %v1123, %v1341
  %v1360 = vld [vmem:[%s0 + $0x2] sm:$0xff]
  %v1361 = vld [vmem:[%s0 + $0xa] sm:$0xff]
  %v1362 = vld [vmem:[%s0 + $0x1a] sm:$0xff]
  %v1363 = vld [vmem:[%s0 + $0x22] sm:$0xff]
  %v1364 = vld [vmem:[%s0 + $0x32] sm:$0xff]
  %v1365 = vld [vmem:[%s0 + $0x3a] sm:$0xff]
  %v1366 = vld [vmem:[%s0 + $0x4a] sm:$0xff]
  %v1367 = vld [vmem:[%s0 + $0x52] sm:$0xff]
  %v1368 = vld [vmem:[%s0 + $0x62] sm:$0xff]
  %v1369 = vld [vmem:[%s0 + $0x6a] sm:$0xff]
  %v1370 = vld [vmem:[%s0 + $0x7a] sm:$0xff]
  %v1371 = vld [vmem:[%s0 + $0x82] sm:$0xff]
  %v1372 = vld [vmem:[%s0 + $0x92] sm:$0xff]
  %v1373 = vld [vmem:[%s0 + $0x9a] sm:$0xff]
  %v1374 = vld [vmem:[%s0 + $0xaa] sm:$0xff]
  %v1375 = vld [vmem:[%s0 + $0xb2] sm:$0xff]
  %v1376 = vld [vmem:[%s1 + $0x2] sm:$0xff]
  %v1377 = vld [vmem:[%s1 + $0xa] sm:$0xff]
  %v1378 = vmul.f32 %v1360, %v1376
  %v1379 = vmul.f32 %v1361, %v1377
  %v1380 = vmul.f32 %v1362, %v1376
  %v1381 = vmul.f32 %v1363, %v1377
  %v1382 = vmul.f32 %v1364, %v1376
  %v1383 = vmul.f32 %v1365, %v1377
  %v1384 = vmul.f32 %v1366, %v1376
  %v1385 = vmul.f32 %v1367, %v1377
  %v1386 = vmul.f32 %v1368, %v1376
  %v1387 = vmul.f32 %v1369, %v1377
  %v1388 = vmul.f32 %v1370, %v1376
  %v1389 = vmul.f32 %v1371, %v1377
  %v1390 = vmul.f32 %v1372, %v1376
  %v1391 = vmul.f32 %v1373, %v1377
  %v1392 = vmul.f32 %v1374, %v1376
  %v1393 = vmul.f32 %v1375, %v1377
  %v1394 = vpack.c.bf16 %v1379, %v1378
  %v1395 = vpack.c.bf16 %v1381, %v1380
  %v1396 = vpack.c.bf16 %v1383, %v1382
  %v1397 = vpack.c.bf16 %v1385, %v1384
  %v1398 = vpack.c.bf16 %v1387, %v1386
  %v1399 = vpack.c.bf16 %v1389, %v1388
  %v1400 = vpack.c.bf16 %v1391, %v1390
  %v1401 = vpack.c.bf16 %v1393, %v1392
  %s1402 = scalar_lea.vmem %s2, 192
  %v1403 = vld [vmem:[%s1402] sm:$0xf]
  %v1404 = vld [vmem:[%s1402 + $0x4] sm:$0xf]
  %v1405 = vld [vmem:[%s1402 + $0x8] sm:$0xf]
  %v1406 = vld [vmem:[%s1402 + $0xc] sm:$0xf]
  %v1407 = vld [vmem:[%s1402 + $0x10] sm:$0xf]
  %v1408 = vld [vmem:[%s1402 + $0x14] sm:$0xf]
  %v1409 = vld [vmem:[%s1402 + $0x18] sm:$0xf]
  %v1410 = vld [vmem:[%s1402 + $0x1c] sm:$0xf]
  %v1419 = vunpack.c.l.b16 %v1403
  %v1420 = vunpack.c.l.b16 %v1404
  %v1421 = vunpack.c.l.b16 %v1405
  %v1422 = vunpack.c.l.b16 %v1406
  %v1423 = vunpack.c.l.b16 %v1407
  %v1424 = vunpack.c.l.b16 %v1408
  %v1425 = vunpack.c.l.b16 %v1409
  %v1426 = vunpack.c.l.b16 %v1410
  %v1427 = vpack.c.b16 %v1420, %v1419
  %v1428 = vpack.c.b16 %v1422, %v1421
  %v1429 = vpack.c.b16 %v1424, %v1423
  %v1430 = vpack.c.b16 %v1426, %v1425
  %v1436 = vsel %vm173, %v1394, 0
  %v1439 = vsel %vm173, %v1395, 0
  %v1442 = vsel %vm173, %v1396, 0
  %v1445 = vsel %vm173, %v1397, 0
  %v1448 = vsel %vm173, %v1398, 0
  %v1451 = vsel %vm173, %v1399, 0
  %v1454 = vsel %vm173, %v1400, 0
  %v1457 = vsel %vm173, %v1401, 0
  %1459 = vmatprep.subr.bf16.mxu0 0
  %1460 = vmatpush1.bf16.msra.mxu0 %v1427
  %1461 = vmatprep.subr.bf16.mxu0 0
  %1462 = vmatpush1.bf16.msra.mxu0 %v1428
  %1463 = vmatprep.subr.bf16.mxu0 0
  %1464 = vmatpush1.bf16.msra.mxu0 %v1429
  %1465 = vmatprep.subr.bf16.mxu0 0
  %1466 = vmatpush1.bf16.msra.mxu0 %v1430
  %1467 = vmatprep.subr.bf16.mxu0 0
  %1468 = vmatpush1.bf16.msra.mxu0 0
  %1469 = vmatprep.subr.bf16.mxu0 0
  %1470 = vmatpush1.bf16.msra.mxu0 0
  %1471 = vmatprep.subr.bf16.mxu0 0
  %1472 = vmatpush1.bf16.msra.mxu0 0
  %1473 = vmatprep.subr.bf16.mxu0 0
  %1474 = vmatpush1.bf16.msra.mxu0 0
  %1475 = vmatprep.subr.bf16.mxu0 0
  %1476 = vmatpush1.bf16.msra.mxu0 0
  %1477 = vmatprep.subr.bf16.mxu0 0
  %1478 = vmatpush1.bf16.msra.mxu0 0
  %1479 = vmatprep.subr.bf16.mxu0 0
  %1480 = vmatpush1.bf16.msra.mxu0 0
  %1481 = vmatprep.subr.bf16.mxu0 0
  %1482 = vmatpush1.bf16.msra.mxu0 0
  %1483 = vmatprep.subr.bf16.mxu0 0
  %1484 = vmatpush1.bf16.msra.mxu0 0
  %1485 = vmatprep.subr.bf16.mxu0 0
  %1486 = vmatpush1.bf16.msra.mxu0 0
  %1487 = vmatprep.subr.bf16.mxu0 0
  %1488 = vmatpush1.bf16.msra.mxu0 0
  %1489 = vmatprep.subr.bf16.mxu0 0
  %1490 = vmatpush1.bf16.msra.mxu0 0
  %1491 = vmatprep.mubr.bf16.mxu0 0
  %1492 = vmatmul.mubr.bf16.gmra.mrb[0].mxu0 %v1436
  %v1493 = vpop.f32.mrb[0].mxu0
  %v1494 = vadd.f32 0.0, %v1493
  %v1495 = vpop.f32.mrb[0].mxu0
  %v1496 = vpop.f32.mrb[0].mxu0
  %v1497 = vadd.f32 0.0, %v1496
  %v1498 = vpop.f32.mrb[0].mxu0
  %1499 = vmatprep.mubr.bf16.mxu0 0
  %1500 = vmatmul.mubr.bf16.gmra.mrb[0].mxu0 %v1439
  %v1501 = vpop.f32.mrb[0].mxu0
  %v1502 = vadd.f32 0.0, %v1501
  %v1503 = vpop.f32.mrb[0].mxu0
  %v1504 = vpop.f32.mrb[0].mxu0
  %v1505 = vadd.f32 0.0, %v1504
  %v1506 = vpop.f32.mrb[0].mxu0
  %1507 = vmatprep.mubr.bf16.mxu0 0
  %1508 = vmatmul.mubr.bf16.gmra.mrb[0].mxu0 %v1442
  %v1509 = vpop.f32.mrb[0].mxu0
  %v1510 = vadd.f32 0.0, %v1509
  %v1511 = vpop.f32.mrb[0].mxu0
  %v1512 = vpop.f32.mrb[0].mxu0
  %v1513 = vadd.f32 0.0, %v1512
  %v1514 = vpop.f32.mrb[0].mxu0
  %1515 = vmatprep.mubr.bf16.mxu0 0
  %1516 = vmatmul.mubr.bf16.gmra.mrb[0].mxu0 %v1445
  %v1517 = vpop.f32.mrb[0].mxu0
  %v1518 = vadd.f32 0.0, %v1517
  %v1519 = vpop.f32.mrb[0].mxu0
  %v1520 = vpop.f32.mrb[0].mxu0
  %v1521 = vadd.f32 0.0, %v1520
  %v1522 = vpop.f32.mrb[0].mxu0
  %1523 = vmatprep.mubr.bf16.mxu0 0
  %1524 = vmatmul.mubr.bf16.gmra.mrb[0].mxu0 %v1448
  %v1525 = vpop.f32.mrb[0].mxu0
  %v1526 = vadd.f32 0.0, %v1525
  %v1527 = vpop.f32.mrb[0].mxu0
  %v1528 = vpop.f32.mrb[0].mxu0
  %v1529 = vadd.f32 0.0, %v1528
  %v1530 = vpop.f32.mrb[0].mxu0
  %1531 = vmatprep.mubr.bf16.mxu0 0
  %1532 = vmatmul.mubr.bf16.gmra.mrb[0].mxu0 %v1451
  %v1533 = vpop.f32.mrb[0].mxu0
  %v1534 = vadd.f32 0.0, %v1533
  %v1535 = vpop.f32.mrb[0].mxu0
  %v1536 = vpop.f32.mrb[0].mxu0
  %v1537 = vadd.f32 0.0, %v1536
  %v1538 = vpop.f32.mrb[0].mxu0
  %1539 = vmatprep.mubr.bf16.mxu0 0
  %1540 = vmatmul.mubr.bf16.gmra.mrb[0].mxu0 %v1454
  %v1541 = vpop.f32.mrb[0].mxu0
  %v1542 = vadd.f32 0.0, %v1541
  %v1543 = vpop.f32.mrb[0].mxu0
  %v1544 = vpop.f32.mrb[0].mxu0
  %v1545 = vadd.f32 0.0, %v1544
  %v1546 = vpop.f32.mrb[0].mxu0
  %1547 = vmatprep.mubr.bf16.mxu0 0
  %1548 = vmatmul.mubr.bf16.gmra.mrb[0].mxu0 %v1457
  %v1549 = vpop.f32.mrb[0].mxu0
  %v1550 = vadd.f32 0.0, %v1549
  %v1551 = vpop.f32.mrb[0].mxu0
  %v1552 = vpop.f32.mrb[0].mxu0
  %v1553 = vadd.f32 0.0, %v1552
  %v1554 = vpop.f32.mrb[0].mxu0
  %1555 = vdwg.mxu0
  %v1556 = vadd.f32 %v1344, %v1494
  %v1557 = vadd.f32 %v1345, %v1497
  %v1558 = vadd.f32 %v1346, %v1502
  %v1559 = vadd.f32 %v1347, %v1505
  %v1560 = vadd.f32 %v1348, %v1510
  %v1561 = vadd.f32 %v1349, %v1513
  %v1562 = vadd.f32 %v1350, %v1518
  %v1563 = vadd.f32 %v1351, %v1521
  %v1564 = vadd.f32 %v1352, %v1526
  %v1565 = vadd.f32 %v1353, %v1529
  %v1566 = vadd.f32 %v1354, %v1534
  %v1567 = vadd.f32 %v1355, %v1537
  %v1568 = vadd.f32 %v1356, %v1542
  %v1569 = vadd.f32 %v1357, %v1545
  %v1570 = vadd.f32 %v1358, %v1550
  %v1571 = vadd.f32 %v1359, %v1553
  %v1572 = vld [vmem:[%s0 + $0x2] sm:$0xff]
  %v1573 = vld [vmem:[%s0 + $0xa] sm:$0xff]
  %v1574 = vld [vmem:[%s0 + $0x1a] sm:$0xff]
  %v1575 = vld [vmem:[%s0 + $0x22] sm:$0xff]
  %v1576 = vld [vmem:[%s0 + $0x32] sm:$0xff]
  %v1577 = vld [vmem:[%s0 + $0x3a] sm:$0xff]
  %v1578 = vld [vmem:[%s0 + $0x4a] sm:$0xff]
  %v1579 = vld [vmem:[%s0 + $0x52] sm:$0xff]
  %v1580 = vld [vmem:[%s0 + $0x62] sm:$0xff]
  %v1581 = vld [vmem:[%s0 + $0x6a] sm:$0xff]
  %v1582 = vld [vmem:[%s0 + $0x7a] sm:$0xff]
  %v1583 = vld [vmem:[%s0 + $0x82] sm:$0xff]
  %v1584 = vld [vmem:[%s0 + $0x92] sm:$0xff]
  %v1585 = vld [vmem:[%s0 + $0x9a] sm:$0xff]
  %v1586 = vld [vmem:[%s0 + $0xaa] sm:$0xff]
  %v1587 = vld [vmem:[%s0 + $0xb2] sm:$0xff]
  %v1588 = vld [vmem:[%s1 + $0x2] sm:$0xff]
  %v1589 = vld [vmem:[%s1 + $0xa] sm:$0xff]
  %v1590 = vmul.f32 %v1572, %v1588
  %v1591 = vmul.f32 %v1573, %v1589
  %v1592 = vmul.f32 %v1574, %v1588
  %v1593 = vmul.f32 %v1575, %v1589
  %v1594 = vmul.f32 %v1576, %v1588
  %v1595 = vmul.f32 %v1577, %v1589
  %v1596 = vmul.f32 %v1578, %v1588
  %v1597 = vmul.f32 %v1579, %v1589
  %v1598 = vmul.f32 %v1580, %v1588
  %v1599 = vmul.f32 %v1581, %v1589
  %v1600 = vmul.f32 %v1582, %v1588
  %v1601 = vmul.f32 %v1583, %v1589
  %v1602 = vmul.f32 %v1584, %v1588
  %v1603 = vmul.f32 %v1585, %v1589
  %v1604 = vmul.f32 %v1586, %v1588
  %v1605 = vmul.f32 %v1587, %v1589
  %v1606 = vpack.c.bf16 %v1591, %v1590
  %v1607 = vpack.c.bf16 %v1593, %v1592
  %v1608 = vpack.c.bf16 %v1595, %v1594
  %v1609 = vpack.c.bf16 %v1597, %v1596
  %v1610 = vpack.c.bf16 %v1599, %v1598
  %v1611 = vpack.c.bf16 %v1601, %v1600
  %v1612 = vpack.c.bf16 %v1603, %v1602
  %v1613 = vpack.c.bf16 %v1605, %v1604
  %s1614 = scalar_lea.vmem %s2, 224
  %v1615 = vld [vmem:[%s1614] sm:$0xf]
  %v1616 = vld [vmem:[%s1614 + $0x4] sm:$0xf]
  %v1617 = vld [vmem:[%s1614 + $0x8] sm:$0xf]
  %v1618 = vld [vmem:[%s1614 + $0xc] sm:$0xf]
  %v1619 = vld [vmem:[%s1614 + $0x10] sm:$0xf]
  %v1620 = vld [vmem:[%s1614 + $0x14] sm:$0xf]
  %v1621 = vld [vmem:[%s1614 + $0x18] sm:$0xf]
  %v1622 = vld [vmem:[%s1614 + $0x1c] sm:$0xf]
  %1631 = vrot.lane.b32.xlu0 %v1606, 124
  %v1632 = vpop.permute.xlu0 %1631
  %1633 = vrot.lane.b32.xlu0 %v1607, 124
  %v1634 = vpop.permute.xlu0 %1633
  %1635 = vrot.lane.b32.xlu0 %v1608, 124
  %v1636 = vpop.permute.xlu0 %1635
  %1637 = vrot.lane.b32.xlu0 %v1609, 124
  %v1638 = vpop.permute.xlu0 %1637
  %1639 = vrot.lane.b32.xlu0 %v1610, 124
  %v1640 = vpop.permute.xlu0 %1639
  %1641 = vrot.lane.b32.xlu0 %v1611, 124
  %v1642 = vpop.permute.xlu0 %1641
  %1643 = vrot.lane.b32.xlu0 %v1612, 124
  %v1644 = vpop.permute.xlu0 %1643
  %1645 = vrot.lane.b32.xlu0 %v1613, 124
  %v1646 = vpop.permute.xlu0 %1645
  %v1655 = vunpack.c.l.b16 %v1615
  %v1656 = vunpack.c.l.b16 %v1616
  %v1657 = vunpack.c.l.b16 %v1617
  %v1658 = vunpack.c.l.b16 %v1618
  %v1659 = vunpack.c.l.b16 %v1619
  %v1660 = vunpack.c.l.b16 %v1620
  %v1661 = vunpack.c.l.b16 %v1621
  %v1662 = vunpack.c.l.b16 %v1622
  %v1663 = vpack.c.b16 %v1656, %v1655
  %v1664 = vpack.c.b16 %v1658, %v1657
  %v1665 = vpack.c.b16 %v1660, %v1659
  %v1666 = vpack.c.b16 %v1662, %v1661
  %v1672 = vsel %vm173, %v1632, 0
  %v1675 = vsel %vm173, %v1634, 0
  %v1678 = vsel %vm173, %v1636, 0
  %v1681 = vsel %vm173, %v1638, 0
  %v1684 = vsel %vm173, %v1640, 0
  %v1687 = vsel %vm173, %v1642, 0
  %v1690 = vsel %vm173, %v1644, 0
  %v1693 = vsel %vm173, %v1646, 0
  %1695 = vmatprep.subr.bf16.mxu0 0
  %1696 = vmatpush1.bf16.msra.mxu0 %v1663
  %1697 = vmatprep.subr.bf16.mxu0 0
  %1698 = vmatpush1.bf16.msra.mxu0 %v1664
  %1699 = vmatprep.subr.bf16.mxu0 0
  %1700 = vmatpush1.bf16.msra.mxu0 %v1665
  %1701 = vmatprep.subr.bf16.mxu0 0
  %1702 = vmatpush1.bf16.msra.mxu0 %v1666
  %1703 = vmatprep.subr.bf16.mxu0 0
  %1704 = vmatpush1.bf16.msra.mxu0 0
  %1705 = vmatprep.subr.bf16.mxu0 0
  %1706 = vmatpush1.bf16.msra.mxu0 0
  %1707 = vmatprep.subr.bf16.mxu0 0
  %1708 = vmatpush1.bf16.msra.mxu0 0
  %1709 = vmatprep.subr.bf16.mxu0 0
  %1710 = vmatpush1.bf16.msra.mxu0 0
  %1711 = vmatprep.subr.bf16.mxu0 0
  %1712 = vmatpush1.bf16.msra.mxu0 0
  %1713 = vmatprep.subr.bf16.mxu0 0
  %1714 = vmatpush1.bf16.msra.mxu0 0
  %1715 = vmatprep.subr.bf16.mxu0 0
  %1716 = vmatpush1.bf16.msra.mxu0 0
  %1717 = vmatprep.subr.bf16.mxu0 0
  %1718 = vmatpush1.bf16.msra.mxu0 0
  %1719 = vmatprep.subr.bf16.mxu0 0
  %1720 = vmatpush1.bf16.msra.mxu0 0
  %1721 = vmatprep.subr.bf16.mxu0 0
  %1722 = vmatpush1.bf16.msra.mxu0 0
  %1723 = vmatprep.subr.bf16.mxu0 0
  %1724 = vmatpush1.bf16.msra.mxu0 0
  %1725 = vmatprep.subr.bf16.mxu0 0
  %1726 = vmatpush1.bf16.msra.mxu0 0
  %1727 = vmatprep.mubr.bf16.mxu0 0
  %1728 = vmatmul.mubr.bf16.gmra.mrb[0].mxu0 %v1672
  %v1729 = vpop.f32.mrb[0].mxu0
  %v1730 = vadd.f32 0.0, %v1729
  %v1731 = vpop.f32.mrb[0].mxu0
  %v1732 = vpop.f32.mrb[0].mxu0
  %v1733 = vadd.f32 0.0, %v1732
  %v1734 = vpop.f32.mrb[0].mxu0
  %1735 = vmatprep.mubr.bf16.mxu0 0
  %1736 = vmatmul.mubr.bf16.gmra.mrb[0].mxu0 %v1675
  %v1737 = vpop.f32.mrb[0].mxu0
  %v1738 = vadd.f32 0.0, %v1737
  %v1739 = vpop.f32.mrb[0].mxu0
  %v1740 = vpop.f32.mrb[0].mxu0
  %v1741 = vadd.f32 0.0, %v1740
  %v1742 = vpop.f32.mrb[0].mxu0
  %1743 = vmatprep.mubr.bf16.mxu0 0
  %1744 = vmatmul.mubr.bf16.gmra.mrb[0].mxu0 %v1678
  %v1745 = vpop.f32.mrb[0].mxu0
  %v1746 = vadd.f32 0.0, %v1745
  %v1747 = vpop.f32.mrb[0].mxu0
  %v1748 = vpop.f32.mrb[0].mxu0
  %v1749 = vadd.f32 0.0, %v1748
  %v1750 = vpop.f32.mrb[0].mxu0
  %1751 = vmatprep.mubr.bf16.mxu0 0
  %1752 = vmatmul.mubr.bf16.gmra.mrb[0].mxu0 %v1681
  %v1753 = vpop.f32.mrb[0].mxu0
  %v1754 = vadd.f32 0.0, %v1753
  %v1755 = vpop.f32.mrb[0].mxu0
  %v1756 = vpop.f32.mrb[0].mxu0
  %v1757 = vadd.f32 0.0, %v1756
  %v1758 = vpop.f32.mrb[0].mxu0
  %1759 = vmatprep.mubr.bf16.mxu0 0
  %1760 = vmatmul.mubr.bf16.gmra.mrb[0].mxu0 %v1684
  %v1761 = vpop.f32.mrb[0].mxu0
  %v1762 = vadd.f32 0.0, %v1761
  %v1763 = vpop.f32.mrb[0].mxu0
  %v1764 = vpop.f32.mrb[0].mxu0
  %v1765 = vadd.f32 0.0, %v1764
  %v1766 = vpop.f32.mrb[0].mxu0
  %1767 = vmatprep.mubr.bf16.mxu0 0
  %1768 = vmatmul.mubr.bf16.gmra.mrb[0].mxu0 %v1687
  %v1769 = vpop.f32.mrb[0].mxu0
  %v1770 = vadd.f32 0.0, %v1769
  %v1771 = vpop.f32.mrb[0].mxu0
  %v1772 = vpop.f32.mrb[0].mxu0
  %v1773 = vadd.f32 0.0, %v1772
  %v1774 = vpop.f32.mrb[0].mxu0
  %1775 = vmatprep.mubr.bf16.mxu0 0
  %1776 = vmatmul.mubr.bf16.gmra.mrb[0].mxu0 %v1690
  %v1777 = vpop.f32.mrb[0].mxu0
  %v1778 = vadd.f32 0.0, %v1777
  %v1779 = vpop.f32.mrb[0].mxu0
  %v1780 = vpop.f32.mrb[0].mxu0
  %v1781 = vadd.f32 0.0, %v1780
  %v1782 = vpop.f32.mrb[0].mxu0
  %1783 = vmatprep.mubr.bf16.mxu0 0
  %1784 = vmatmul.mubr.bf16.gmra.mrb[0].mxu0 %v1693
  %v1785 = vpop.f32.mrb[0].mxu0
  %v1786 = vadd.f32 0.0, %v1785
  %v1787 = vpop.f32.mrb[0].mxu0
  %v1788 = vpop.f32.mrb[0].mxu0
  %v1789 = vadd.f32 0.0, %v1788
  %v1790 = vpop.f32.mrb[0].mxu0
  %1791 = vdwg.mxu0
  %v1792 = vadd.f32 %v1556, %v1730
  %v1793 = vadd.f32 %v1557, %v1733
  %v1794 = vadd.f32 %v1558, %v1738
  %v1795 = vadd.f32 %v1559, %v1741
  %v1796 = vadd.f32 %v1560, %v1746
  %v1797 = vadd.f32 %v1561, %v1749
  %v1798 = vadd.f32 %v1562, %v1754
  %v1799 = vadd.f32 %v1563, %v1757
  %v1800 = vadd.f32 %v1564, %v1762
  %v1801 = vadd.f32 %v1565, %v1765
  %v1802 = vadd.f32 %v1566, %v1770
  %v1803 = vadd.f32 %v1567, %v1773
  %v1804 = vadd.f32 %v1568, %v1778
  %v1805 = vadd.f32 %v1569, %v1781
  %v1806 = vadd.f32 %v1570, %v1786
  %v1807 = vadd.f32 %v1571, %v1789
  %v1808 = vld [vmem:[%s0 + $0x2] sm:$0xff]
  %v1809 = vld [vmem:[%s0 + $0xa] sm:$0xff]
  %v1810 = vld [vmem:[%s0 + $0x1a] sm:$0xff]
  %v1811 = vld [vmem:[%s0 + $0x22] sm:$0xff]
  %v1812 = vld [vmem:[%s0 + $0x32] sm:$0xff]
  %v1813 = vld [vmem:[%s0 + $0x3a] sm:$0xff]
  %v1814 = vld [vmem:[%s0 + $0x4a] sm:$0xff]
  %v1815 = vld [vmem:[%s0 + $0x52] sm:$0xff]
  %v1816 = vld [vmem:[%s0 + $0x62] sm:$0xff]
  %v1817 = vld [vmem:[%s0 + $0x6a] sm:$0xff]
  %v1818 = vld [vmem:[%s0 + $0x7a] sm:$0xff]
  %v1819 = vld [vmem:[%s0 + $0x82] sm:$0xff]
  %v1820 = vld [vmem:[%s0 + $0x92] sm:$0xff]
  %v1821 = vld [vmem:[%s0 + $0x9a] sm:$0xff]
  %v1822 = vld [vmem:[%s0 + $0xaa] sm:$0xff]
  %v1823 = vld [vmem:[%s0 + $0xb2] sm:$0xff]
  %v1824 = vld [vmem:[%s1 + $0x2] sm:$0xff]
  %v1825 = vld [vmem:[%s1 + $0xa] sm:$0xff]
  %v1826 = vmul.f32 %v1808, %v1824
  %v1827 = vmul.f32 %v1809, %v1825
  %v1828 = vmul.f32 %v1810, %v1824
  %v1829 = vmul.f32 %v1811, %v1825
  %v1830 = vmul.f32 %v1812, %v1824
  %v1831 = vmul.f32 %v1813, %v1825
  %v1832 = vmul.f32 %v1814, %v1824
  %v1833 = vmul.f32 %v1815, %v1825
  %v1834 = vmul.f32 %v1816, %v1824
  %v1835 = vmul.f32 %v1817, %v1825
  %v1836 = vmul.f32 %v1818, %v1824
  %v1837 = vmul.f32 %v1819, %v1825
  %v1838 = vmul.f32 %v1820, %v1824
  %v1839 = vmul.f32 %v1821, %v1825
  %v1840 = vmul.f32 %v1822, %v1824
  %v1841 = vmul.f32 %v1823, %v1825
  %v1842 = vpack.c.bf16 %v1827, %v1826
  %v1843 = vpack.c.bf16 %v1829, %v1828
  %v1844 = vpack.c.bf16 %v1831, %v1830
  %v1845 = vpack.c.bf16 %v1833, %v1832
  %v1846 = vpack.c.bf16 %v1835, %v1834
  %v1847 = vpack.c.bf16 %v1837, %v1836
  %v1848 = vpack.c.bf16 %v1839, %v1838
  %v1849 = vpack.c.bf16 %v1841, %v1840
  %s1850 = scalar_lea.vmem %s2, 256
  %v1851 = vld [vmem:[%s1850] sm:$0xf]
  %v1852 = vld [vmem:[%s1850 + $0x4] sm:$0xf]
  %v1853 = vld [vmem:[%s1850 + $0x8] sm:$0xf]
  %v1854 = vld [vmem:[%s1850 + $0xc] sm:$0xf]
  %v1855 = vld [vmem:[%s1850 + $0x10] sm:$0xf]
  %v1856 = vld [vmem:[%s1850 + $0x14] sm:$0xf]
  %v1857 = vld [vmem:[%s1850 + $0x18] sm:$0xf]
  %v1858 = vld [vmem:[%s1850 + $0x1c] sm:$0xf]
  %1867 = vrot.lane.b32.xlu0 %v1842, 120
  %v1868 = vpop.permute.xlu0 %1867
  %1869 = vrot.lane.b32.xlu0 %v1843, 120
  %v1870 = vpop.permute.xlu0 %1869
  %1871 = vrot.lane.b32.xlu0 %v1844, 120
  %v1872 = vpop.permute.xlu0 %1871
  %1873 = vrot.lane.b32.xlu0 %v1845, 120
  %v1874 = vpop.permute.xlu0 %1873
  %1875 = vrot.lane.b32.xlu0 %v1846, 120
  %v1876 = vpop.permute.xlu0 %1875
  %1877 = vrot.lane.b32.xlu0 %v1847, 120
  %v1878 = vpop.permute.xlu0 %1877
  %1879 = vrot.lane.b32.xlu0 %v1848, 120
  %v1880 = vpop.permute.xlu0 %1879
  %1881 = vrot.lane.b32.xlu0 %v1849, 120
  %v1882 = vpop.permute.xlu0 %1881
  %v1891 = vunpack.c.l.b16 %v1851
  %v1892 = vunpack.c.l.b16 %v1852
  %v1893 = vunpack.c.l.b16 %v1853
  %v1894 = vunpack.c.l.b16 %v1854
  %v1895 = vunpack.c.l.b16 %v1855
  %v1896 = vunpack.c.l.b16 %v1856
  %v1897 = vunpack.c.l.b16 %v1857
  %v1898 = vunpack.c.l.b16 %v1858
  %v1899 = vpack.c.b16 %v1892, %v1891
  %v1900 = vpack.c.b16 %v1894, %v1893
  %v1901 = vpack.c.b16 %v1896, %v1895
  %v1902 = vpack.c.b16 %v1898, %v1897
  %v1908 = vsel %vm173, %v1868, 0
  %v1911 = vsel %vm173, %v1870, 0
  %v1914 = vsel %vm173, %v1872, 0
  %v1917 = vsel %vm173, %v1874, 0
  %v1920 = vsel %vm173, %v1876, 0
  %v1923 = vsel %vm173, %v1878, 0
  %v1926 = vsel %vm173, %v1880, 0
  %v1929 = vsel %vm173, %v1882, 0
  %1931 = vmatprep.subr.bf16.mxu0 0
  %1932 = vmatpush1.bf16.msra.mxu0 %v1899
  %1933 = vmatprep.subr.bf16.mxu0 0
  %1934 = vmatpush1.bf16.msra.mxu0 %v1900
  %1935 = vmatprep.subr.bf16.mxu0 0
  %1936 = vmatpush1.bf16.msra.mxu0 %v1901
  %1937 = vmatprep.subr.bf16.mxu0 0
  %1938 = vmatpush1.bf16.msra.mxu0 %v1902
  %1939 = vmatprep.subr.bf16.mxu0 0
  %1940 = vmatpush1.bf16.msra.mxu0 0
  %1941 = vmatprep.subr.bf16.mxu0 0
  %1942 = vmatpush1.bf16.msra.mxu0 0
  %1943 = vmatprep.subr.bf16.mxu0 0
  %1944 = vmatpush1.bf16.msra.mxu0 0
  %1945 = vmatprep.subr.bf16.mxu0 0
  %1946 = vmatpush1.bf16.msra.mxu0 0
  %1947 = vmatprep.subr.bf16.mxu0 0
  %1948 = vmatpush1.bf16.msra.mxu0 0
  %1949 = vmatprep.subr.bf16.mxu0 0
  %1950 = vmatpush1.bf16.msra.mxu0 0
  %1951 = vmatprep.subr.bf16.mxu0 0
  %1952 = vmatpush1.bf16.msra.mxu0 0
  %1953 = vmatprep.subr.bf16.mxu0 0
  %1954 = vmatpush1.bf16.msra.mxu0 0
  %1955 = vmatprep.subr.bf16.mxu0 0
  %1956 = vmatpush1.bf16.msra.mxu0 0
  %1957 = vmatprep.subr.bf16.mxu0 0
  %1958 = vmatpush1.bf16.msra.mxu0 0
  %1959 = vmatprep.subr.bf16.mxu0 0
  %1960 = vmatpush1.bf16.msra.mxu0 0
  %1961 = vmatprep.subr.bf16.mxu0 0
  %1962 = vmatpush1.bf16.msra.mxu0 0
  %1963 = vmatprep.mubr.bf16.mxu0 0
  %1964 = vmatmul.mubr.bf16.gmra.mrb[0].mxu0 %v1908
  %v1965 = vpop.f32.mrb[0].mxu0
  %v1966 = vadd.f32 0.0, %v1965
  %v1967 = vpop.f32.mrb[0].mxu0
  %v1968 = vpop.f32.mrb[0].mxu0
  %v1969 = vadd.f32 0.0, %v1968
  %v1970 = vpop.f32.mrb[0].mxu0
  %1971 = vmatprep.mubr.bf16.mxu0 0
  %1972 = vmatmul.mubr.bf16.gmra.mrb[0].mxu0 %v1911
  %v1973 = vpop.f32.mrb[0].mxu0
  %v1974 = vadd.f32 0.0, %v1973
  %v1975 = vpop.f32.mrb[0].mxu0
  %v1976 = vpop.f32.mrb[0].mxu0
  %v1977 = vadd.f32 0.0, %v1976
  %v1978 = vpop.f32.mrb[0].mxu0
  %1979 = vmatprep.mubr.bf16.mxu0 0
  %1980 = vmatmul.mubr.bf16.gmra.mrb[0].mxu0 %v1914
  %v1981 = vpop.f32.mrb[0].mxu0
  %v1982 = vadd.f32 0.0, %v1981
  %v1983 = vpop.f32.mrb[0].mxu0
  %v1984 = vpop.f32.mrb[0].mxu0
  %v1985 = vadd.f32 0.0, %v1984
  %v1986 = vpop.f32.mrb[0].mxu0
  %1987 = vmatprep.mubr.bf16.mxu0 0
  %1988 = vmatmul.mubr.bf16.gmra.mrb[0].mxu0 %v1917
  %v1989 = vpop.f32.mrb[0].mxu0
  %v1990 = vadd.f32 0.0, %v1989
  %v1991 = vpop.f32.mrb[0].mxu0
  %v1992 = vpop.f32.mrb[0].mxu0
  %v1993 = vadd.f32 0.0, %v1992
  %v1994 = vpop.f32.mrb[0].mxu0
  %1995 = vmatprep.mubr.bf16.mxu0 0
  %1996 = vmatmul.mubr.bf16.gmra.mrb[0].mxu0 %v1920
  %v1997 = vpop.f32.mrb[0].mxu0
  %v1998 = vadd.f32 0.0, %v1997
  %v1999 = vpop.f32.mrb[0].mxu0
  %v2000 = vpop.f32.mrb[0].mxu0
  %v2001 = vadd.f32 0.0, %v2000
  %v2002 = vpop.f32.mrb[0].mxu0
  %2003 = vmatprep.mubr.bf16.mxu0 0
  %2004 = vmatmul.mubr.bf16.gmra.mrb[0].mxu0 %v1923
  %v2005 = vpop.f32.mrb[0].mxu0
  %v2006 = vadd.f32 0.0, %v2005
  %v2007 = vpop.f32.mrb[0].mxu0
  %v2008 = vpop.f32.mrb[0].mxu0
  %v2009 = vadd.f32 0.0, %v2008
  %v2010 = vpop.f32.mrb[0].mxu0
  %2011 = vmatprep.mubr.bf16.mxu0 0
  %2012 = vmatmul.mubr.bf16.gmra.mrb[0].mxu0 %v1926
  %v2013 = vpop.f32.mrb[0].mxu0
  %v2014 = vadd.f32 0.0, %v2013
  %v2015 = vpop.f32.mrb[0].mxu0
  %v2016 = vpop.f32.mrb[0].mxu0
  %v2017 = vadd.f32 0.0, %v2016
  %v2018 = vpop.f32.mrb[0].mxu0
  %2019 = vmatprep.mubr.bf16.mxu0 0
  %2020 = vmatmul.mubr.bf16.gmra.mrb[0].mxu0 %v1929
  %v2021 = vpop.f32.mrb[0].mxu0
  %v2022 = vadd.f32 0.0, %v2021
  %v2023 = vpop.f32.mrb[0].mxu0
  %v2024 = vpop.f32.mrb[0].mxu0
  %v2025 = vadd.f32 0.0, %v2024
  %v2026 = vpop.f32.mrb[0].mxu0
  %2027 = vdwg.mxu0
  %v2028 = vadd.f32 %v1792, %v1966
  %v2029 = vadd.f32 %v1793, %v1969
  %v2030 = vadd.f32 %v1794, %v1974
  %v2031 = vadd.f32 %v1795, %v1977
  %v2032 = vadd.f32 %v1796, %v1982
  %v2033 = vadd.f32 %v1797, %v1985
  %v2034 = vadd.f32 %v1798, %v1990
  %v2035 = vadd.f32 %v1799, %v1993
  %v2036 = vadd.f32 %v1800, %v1998
  %v2037 = vadd.f32 %v1801, %v2001
  %v2038 = vadd.f32 %v1802, %v2006
  %v2039 = vadd.f32 %v1803, %v2009
  %v2040 = vadd.f32 %v1804, %v2014
  %v2041 = vadd.f32 %v1805, %v2017
  %v2042 = vadd.f32 %v1806, %v2022
  %v2043 = vadd.f32 %v1807, %v2025
  %v2044 = vld [vmem:[%s3] sm:$0x1]
  %v2046 = vlaneseq
  %v2047 = vshrl.u32 %v2046, 7
  %v2048 = vsub.s32 0, %v2047
  %v2049 = vrot.slane %v2044, %v2048
  %v2051 = vadd.f32 %v2028, %v2049
  %v2052 = vadd.f32 %v2029, %v2049
  %v2053 = vadd.f32 %v2030, %v2049
  %v2054 = vadd.f32 %v2031, %v2049
  %v2055 = vadd.f32 %v2032, %v2049
  %v2056 = vadd.f32 %v2033, %v2049
  %v2057 = vadd.f32 %v2034, %v2049
  %v2058 = vadd.f32 %v2035, %v2049
  %v2059 = vadd.f32 %v2036, %v2049
  %v2060 = vadd.f32 %v2037, %v2049
  %v2061 = vadd.f32 %v2038, %v2049
  %v2062 = vadd.f32 %v2039, %v2049
  %v2063 = vadd.f32 %v2040, %v2049
  %v2064 = vadd.f32 %v2041, %v2049
  %v2065 = vadd.f32 %v2042, %v2049
  %v2066 = vadd.f32 %v2043, %v2049
  %v2067 = vmax.f32 %v2051, 0.0
  %v2068 = vmax.f32 %v2052, 0.0
  %v2069 = vmax.f32 %v2053, 0.0
  %v2070 = vmax.f32 %v2054, 0.0
  %v2071 = vmax.f32 %v2055, 0.0
  %v2072 = vmax.f32 %v2056, 0.0
  %v2073 = vmax.f32 %v2057, 0.0
  %v2074 = vmax.f32 %v2058, 0.0
  %v2075 = vmax.f32 %v2059, 0.0
  %v2076 = vmax.f32 %v2060, 0.0
  %v2077 = vmax.f32 %v2061, 0.0
  %v2078 = vmax.f32 %v2062, 0.0
  %v2079 = vmax.f32 %v2063, 0.0
  %v2080 = vmax.f32 %v2064, 0.0
  %v2081 = vmax.f32 %v2065, 0.0
  %v2082 = vmax.f32 %v2066, 0.0
  %v2083 = vadd.f32 %v2067, %v2068
  %v2084 = vrot.slane %v2083, 4
  %v2085 = vadd.f32 %v2083, %v2084
  %v2086 = vrot.slane %v2085, 2
  %v2087 = vadd.f32 %v2085, %v2086
  %v2088 = vrot.slane %v2087, 1
  %v2089 = vadd.f32 %v2087, %v2088
  %v2090 = vadd.f32 %v2069, %v2070
  %v2091 = vrot.slane %v2090, 4
  %v2092 = vadd.f32 %v2090, %v2091
  %v2093 = vrot.slane %v2092, 2
  %v2094 = vadd.f32 %v2092, %v2093
  %v2095 = vrot.slane %v2094, 1
  %v2096 = vadd.f32 %v2094, %v2095
  %v2097 = vadd.f32 %v2071, %v2072
  %v2098 = vrot.slane %v2097, 4
  %v2099 = vadd.f32 %v2097, %v2098
  %v2100 = vrot.slane %v2099, 2
  %v2101 = vadd.f32 %v2099, %v2100
  %v2102 = vrot.slane %v2101, 1
  %v2103 = vadd.f32 %v2101, %v2102
  %v2104 = vadd.f32 %v2073, %v2074
  %v2105 = vrot.slane %v2104, 4
  %v2106 = vadd.f32 %v2104, %v2105
  %v2107 = vrot.slane %v2106, 2
  %v2108 = vadd.f32 %v2106, %v2107
  %v2109 = vrot.slane %v2108, 1
  %v2110 = vadd.f32 %v2108, %v2109
  %v2111 = vadd.f32 %v2075, %v2076
  %v2112 = vrot.slane %v2111, 4
  %v2113 = vadd.f32 %v2111, %v2112
  %v2114 = vrot.slane %v2113, 2
  %v2115 = vadd.f32 %v2113, %v2114
  %v2116 = vrot.slane %v2115, 1
  %v2117 = vadd.f32 %v2115, %v2116
  %v2118 = vadd.f32 %v2077, %v2078
  %v2119 = vrot.slane %v2118, 4
  %v2120 = vadd.f32 %v2118, %v2119
  %v2121 = vrot.slane %v2120, 2
  %v2122 = vadd.f32 %v2120, %v2121
  %v2123 = vrot.slane %v2122, 1
  %v2124 = vadd.f32 %v2122, %v2123
  %v2125 = vadd.f32 %v2079, %v2080
  %v2126 = vrot.slane %v2125, 4
  %v2127 = vadd.f32 %v2125, %v2126
  %v2128 = vrot.slane %v2127, 2
  %v2129 = vadd.f32 %v2127, %v2128
  %v2130 = vrot.slane %v2129, 1
  %v2131 = vadd.f32 %v2129, %v2130
  %v2132 = vadd.f32 %v2081, %v2082
  %v2133 = vrot.slane %v2132, 4
  %v2134 = vadd.f32 %v2132, %v2133
  %v2135 = vrot.slane %v2134, 2
  %v2136 = vadd.f32 %v2134, %v2135
  %v2137 = vrot.slane %v2136, 1
  %v2138 = vadd.f32 %v2136, %v2137
  %v2139 = vld [vmem:[%s4] sm:$0xff]
  %v2140 = vld [vmem:[%s4 + $0x8] sm:$0xff]
  %v2141 = vld [vmem:[%s4 + $0x10] sm:$0xff]
  %v2142 = vld [vmem:[%s4 + $0x18] sm:$0xff]
  %v2143 = vld [vmem:[%s4 + $0x20] sm:$0xff]
  %v2144 = vld [vmem:[%s4 + $0x28] sm:$0xff]
  %v2145 = vld [vmem:[%s4 + $0x30] sm:$0xff]
  %v2146 = vld [vmem:[%s4 + $0x38] sm:$0xff]
  %v2147 = vld [vmem:[%s4 + $0x40] sm:$0xff]
  %v2148 = vld [vmem:[%s4 + $0x48] sm:$0xff]
  %v2149 = vld [vmem:[%s4 + $0x50] sm:$0xff]
  %v2150 = vld [vmem:[%s4 + $0x58] sm:$0xff]
  %v2151 = vld [vmem:[%s4 + $0x60] sm:$0xff]
  %v2152 = vld [vmem:[%s4 + $0x68] sm:$0xff]
  %v2153 = vld [vmem:[%s4 + $0x70] sm:$0xff]
  %v2154 = vld [vmem:[%s4 + $0x78] sm:$0xff]
  %v2155 = vld [vmem:[%s5] sm:$0x1]
  %v2157 = vlaneseq
  %v2158 = vshrl.u32 %v2157, 7
  %v2159 = vsub.s32 0, %v2158
  %v2160 = vrot.slane %v2155, %v2159
  %vm2170 = vcmask 1041409
  %v2171 = vsel %vm2170, %v2096, %v2089
  %vm2172 = vcmask 1042434
  %v2173 = vsel %vm2172, %v2103, %v2171
  %vm2174 = vcmask 1043459
  %v2175 = vsel %vm2174, %v2110, %v2173
  %vm2176 = vcmask 1044484
  %v2177 = vsel %vm2176, %v2117, %v2175
  %vm2178 = vcmask 1045509
  %v2179 = vsel %vm2178, %v2124, %v2177
  %vm2180 = vcmask 1046534
  %v2181 = vsel %vm2180, %v2131, %v2179
  %vm2182 = vcmask 1047559
  %v2183 = vsel %vm2182, %v2138, %v2181
  %2185 = vmatprep.subr.mxu0 0.0
  %2186 = vmatpush1.msra.mxu0 %v2139
  %2187 = vmatprep.subr.mxu0 0.0
  %2188 = vmatpush1.msra.mxu0 %v2140
  %2189 = vmatprep.subr.mxu0 0.0
  %2190 = vmatpush1.msra.mxu0 %v2141
  %2191 = vmatprep.subr.mxu0 0.0
  %2192 = vmatpush1.msra.mxu0 %v2142
  %2193 = vmatprep.subr.mxu0 0.0
  %2194 = vmatpush1.msra.mxu0 %v2143
  %2195 = vmatprep.subr.mxu0 0.0
  %2196 = vmatpush1.msra.mxu0 %v2144
  %2197 = vmatprep.subr.mxu0 0.0
  %2198 = vmatpush1.msra.mxu0 %v2145
  %2199 = vmatprep.subr.mxu0 0.0
  %2200 = vmatpush1.msra.mxu0 %v2146
  %2201 = vmatprep.subr.mxu0 0.0
  %2202 = vmatpush1.msra.mxu0 %v2147
  %2203 = vmatprep.subr.mxu0 0.0
  %2204 = vmatpush1.msra.mxu0 %v2148
  %2205 = vmatprep.subr.mxu0 0.0
  %2206 = vmatpush1.msra.mxu0 %v2149
  %2207 = vmatprep.subr.mxu0 0.0
  %2208 = vmatpush1.msra.mxu0 %v2150
  %2209 = vmatprep.subr.mxu0 0.0
  %2210 = vmatpush1.msra.mxu0 %v2151
  %2211 = vmatprep.subr.mxu0 0.0
  %2212 = vmatpush1.msra.mxu0 %v2152
  %2213 = vmatprep.subr.mxu0 0.0
  %2214 = vmatpush1.msra.mxu0 %v2153
  %2215 = vmatprep.subr.mxu0 0.0
  %2216 = vmatpush1.msra.mxu0 %v2154
  %2217 = vmatprep.subr.mxu0 0.0
  %2218 = vmatpush1.msra.mxu0 0.0
  %2219 = vmatprep.subr.mxu0 0.0
  %2220 = vmatpush1.msra.mxu0 0.0
  %2221 = vmatprep.subr.mxu0 0.0
  %2222 = vmatpush1.msra.mxu0 0.0
  %2223 = vmatprep.subr.mxu0 0.0
  %2224 = vmatpush1.msra.mxu0 0.0
  %2225 = vmatprep.subr.mxu0 0.0
  %2226 = vmatpush1.msra.mxu0 0.0
  %2227 = vmatprep.subr.mxu0 0.0
  %2228 = vmatpush1.msra.mxu0 0.0
  %2229 = vmatprep.subr.mxu0 0.0
  %2230 = vmatpush1.msra.mxu0 0.0
  %2231 = vmatprep.subr.mxu0 0.0
  %2232 = vmatpush1.msra.mxu0 0.0
  %2233 = vmatprep.subr.mxu0 0.0
  %2234 = vmatpush1.msra.mxu0 0.0
  %2235 = vmatprep.subr.mxu0 0.0
  %2236 = vmatpush1.msra.mxu0 0.0
  %2237 = vmatprep.subr.mxu0 0.0
  %2238 = vmatpush1.msra.mxu0 0.0
  %2239 = vmatprep.subr.mxu0 0.0
  %2240 = vmatpush1.msra.mxu0 0.0
  %2241 = vmatprep.subr.mxu0 0.0
  %2242 = vmatpush1.msra.mxu0 0.0
  %2243 = vmatprep.subr.mxu0 0.0
  %2244 = vmatpush1.msra.mxu0 0.0
  %2245 = vmatprep.subr.mxu0 0.0
  %2246 = vmatpush1.msra.mxu0 0.0
  %2247 = vmatprep.subr.mxu0 0.0
  %2248 = vmatpush1.msra.mxu0 0.0
  %2249 = vmatprep.mubr.f32.mxu0 0.0
  %2250 = vmatmul.mubr.f32.gmra.mrb[0].mxu0 %v2183
  %v2251 = vpop.f32.mrb[0].mxu0
  %v2252 = vadd.f32 %v2160, %v2251
  %v2253 = vpop.f32.mrb[0].mxu0
  %2254 = vdwg.mxu0
  %2255 = vst [vmem:[%s6] sm:$0xff] %v2252
  // Predicated region
  $region26: #{masked_model_forward.1} parent=0 // pred_check
    _
  $region27: #{masked_model_forward.1} parent=0 // pred_check_branch
    %2257 = sbr.rel (0) target = $region29
  $region28: #{masked_model_forward.1} parent=0 // pred_region
    _
  $region29: #{masked_model_forward.1} parent=0 // pred_fallthru
    _
  // Predicated region
  $region30: #{masked_model_forward.1} parent=0 // pred_check
    _
  $region31: #{masked_model_forward.1} parent=0 // pred_check_branch
    %2259 = sbr.rel (0) target = $region33
  $region32: #{masked_model_forward.1} parent=0 // pred_region
    _
  $region33: #{masked_model_forward.1} parent=0 // pred_fallthru
    _

</llo_original>
